<compile_context>
chip_gen: v5e
topology: v5e:2x2
jax: 0.10.0
libtpu: 0.0.40
codegen_flags: <defaults>
</compile_context>

<pallas_src>
import functools

import jax
import jax.numpy as jnp
from jax.scipy.linalg import solve_triangular
from jax.experimental import pallas as pl
from jax.experimental.pallas import tpu as pltpu

_LANE = 128
_SUBLANE = 8
_HIGHEST = jax.lax.Precision.HIGHEST


def _round_up(x, m):
    return ((x + m - 1) // m) * m


def _cdiv(a, b):
    return -(-a // b)


def _hw_config():
    """Generation-gated tile / VMEM budgets (v5e/v6e: 128 MiB VMEM, v7x: 64 MiB)."""
    try:
        vmem = int(pltpu.get_tpu_info().vmem_capacity_bytes)
    except Exception:
        vmem = 64 * 1024 * 1024                 # conservative (v7x-sized) default
    if vmem >= 100 * 1024 * 1024:               # v5e / v6e (128 MiB physical)
        return dict(tile=2048,
                    vmem_limit=80 * 1024 * 1024,
                    resident_b_bytes=24 * 1024 * 1024)
    return dict(tile=2048,                      # v7x: 64 MiB per TensorCore
                vmem_limit=48 * 1024 * 1024,
                resident_b_bytes=8 * 1024 * 1024)


_CFG = _hw_config()


def _pick_tile(dim, align, target):
    """Largest ~target-sized, `align`-ed tile; padding waste <= one align/tile."""
    dim = max(int(dim), 1)
    n_tiles = _cdiv(dim, target)
    return _round_up(_cdiv(dim, n_tiles), align)


# ----------------------------------------------------------------------------
# Shared tiled-matmul kernel body (A @ B and A^T @ B variants)
# ----------------------------------------------------------------------------
def _mm_kernel(a_ref, b_ref, o_ref, *, dim_numbers, b_resident, rt, precision):
    r = pl.program_id(1)                        # reduction axis (last, "arbitrary")

    @pl.when(r == 0)
    def _init():
        # Output block index is constant across r -> it stays VMEM-resident,
        # so we accumulate directly into it (no scratch accumulator needed).
        o_ref[...] = jnp.zeros_like(o_ref)

    if b_resident:
        # B was DMA'd once (constant index_map); slice the current reduction slab.
        align = _LANE if rt % _LANE == 0 else _SUBLANE
        off = pl.multiple_of(r * rt, align)
        b = b_ref[pl.ds(off, rt), :]
    else:
        b = b_ref[...]

    o_ref[...] += jax.lax.dot_general(
        a_ref[...], b, dimension_numbers=dim_numbers,
        precision=precision, preferred_element_type=jnp.float32)


@functools.partial(jax.jit, static_argnames=("precision",))
def matmul_ab(a, b, precision=None):
    """C = A @ B with A:(M,K), B:(K,N); f32 accumulation; pads to the tile grid."""
    m, k = a.shape
    k2, n = b.shape
    assert k == k2, (a.shape, b.shape)
    if a.dtype != b.dtype:
        b = b.astype(a.dtype)                   # cast outside the kernel body
    tm = _pick_tile(m, _SUBLANE, _CFG["tile"])
    tk = _pick_tile(k, _LANE, _CFG["tile"])
    mp = _round_up(m, tm)
    kp = _round_up(k, tk)
    a_p = a if (mp == m and kp == k) else jnp.pad(a, ((0, mp - m), (0, kp - k)))
    b_p = b if kp == k else jnp.pad(b, ((0, kp - k), (0, 0)))
    resident = kp * n * b.dtype.itemsize <= _CFG["resident_b_bytes"]
    b_spec = (pl.BlockSpec((kp, n), lambda i, r: (0, 0)) if resident
              else pl.BlockSpec((tk, n), lambda i, r: (r, 0)))
    out = pl.pallas_call(
        functools.partial(_mm_kernel, dim_numbers=(((1,), (0,)), ((), ())),
                          b_resident=resident, rt=tk, precision=precision),
        out_shape=jax.ShapeDtypeStruct((mp, n), jnp.float32),
        grid=(mp // tm, kp // tk),
        in_specs=[pl.BlockSpec((tm, tk), lambda i, r: (i, r)),  # A tile, streamed
                  b_spec],
        out_specs=pl.BlockSpec((tm, n), lambda i, r: (i, 0)),
        compiler_params=pltpu.CompilerParams(
            dimension_semantics=("parallel", "arbitrary"),
            vmem_limit_bytes=_CFG["vmem_limit"]),
    )(a_p, b_p)
    return out[:m] if mp != m else out


@functools.partial(jax.jit, static_argnames=("precision",))
def matmul_atb(a, b, precision=None):
    """C = A^T @ B with A:(M,K), B:(M,N) -> (K,N); no materialized transpose of A."""
    m, k = a.shape
    m2, n = b.shape
    assert m == m2, (a.shape, b.shape)
    if a.dtype != b.dtype:
        b = b.astype(a.dtype)                   # cast outside the kernel body
    tko = _pick_tile(k, _LANE, _CFG["tile"])    # output-row tile (A columns)
    tmr = _pick_tile(m, _SUBLANE, _CFG["tile"])  # reduction tile (A rows)
    kp = _round_up(k, tko)
    mp = _round_up(m, tmr)
    a_p = a if (mp == m and kp == k) else jnp.pad(a, ((0, mp - m), (0, kp - k)))
    b_p = b if mp == m else jnp.pad(b, ((0, mp - m), (0, 0)))
    resident = mp * n * b.dtype.itemsize <= _CFG["resident_b_bytes"]
    b_spec = (pl.BlockSpec((mp, n), lambda i, r: (0, 0)) if resident
              else pl.BlockSpec((tmr, n), lambda i, r: (r, 0)))
    out = pl.pallas_call(
        functools.partial(_mm_kernel, dim_numbers=(((0,), (0,)), ((), ())),
                          b_resident=resident, rt=tmr, precision=precision),
        out_shape=jax.ShapeDtypeStruct((kp, n), jnp.float32),
        grid=(kp // tko, mp // tmr),
        in_specs=[pl.BlockSpec((tmr, tko), lambda i, r: (r, i)),  # A tile, streamed
                  b_spec],
        out_specs=pl.BlockSpec((tko, n), lambda i, r: (i, 0)),
        compiler_params=pltpu.CompilerParams(
            dimension_semantics=("parallel", "arbitrary"),
            vmem_limit_bytes=_CFG["vmem_limit"]),
    )(a_p, b_p)
    return out[:k] if kp != k else out


# ----------------------------------------------------------------------------
# Gram kernel: G = Y^T Y reading Y once (2 parallel chunks for v7x megacore)
# ----------------------------------------------------------------------------
def _gram_kernel(y_ref, o_ref, *, precision):
    r = pl.program_id(1)

    @pl.when(r == 0)
    def _init():
        o_ref[...] = jnp.zeros_like(o_ref)

    y = y_ref[...]
    o_ref[...] += jax.lax.dot_general(
        y, y, dimension_numbers=(((0,), (0,)), ((), ())),
        precision=precision, preferred_element_type=jnp.float32)


@jax.jit
def gram(y):
    """G = Y^T Y (f32, HIGHEST precision). Streams Y once instead of twice; the
    reduction is split into 2 parallel chunks (partials summed in JAX) so both
    v7x TensorCores get work."""
    m, n = y.shape
    nchunks = 2 if m >= 2 * _SUBLANE else 1
    chunk = _cdiv(m, nchunks)
    tmr = _pick_tile(chunk, _SUBLANE, _CFG["tile"])
    steps = _cdiv(chunk, tmr)
    mp = nchunks * steps * tmr
    y_p = y if mp == m else jnp.pad(y, ((0, mp - m), (0, 0)))
    out = pl.pallas_call(
        functools.partial(_gram_kernel, precision=_HIGHEST),
        out_shape=jax.ShapeDtypeStruct((nchunks, n, n), jnp.float32),
        grid=(nchunks, steps),
        in_specs=[pl.BlockSpec((tmr, n), lambda c, r: (c * steps + r, 0))],
        out_specs=pl.BlockSpec((None, n, n), lambda c, r: (c, 0, 0)),
        compiler_params=pltpu.CompilerParams(
            dimension_semantics=("parallel", "arbitrary"),
            vmem_limit_bytes=_CFG["vmem_limit"]),
    )(y_p)
    return jnp.sum(out, axis=0)


# ----------------------------------------------------------------------------
# CholeskyQR^2 orthonormalization (matmul-dominated, reuses the Pallas kernels)
# ----------------------------------------------------------------------------
def _cholesky_qr_once(y, q):
    """One CholeskyQR pass on the first q columns of y (remaining cols are 0)."""
    q_pad = y.shape[1]
    g = gram(y)[:q, :q]                                   # f32 Gram, HIGHEST
    # TODO(synk): add a conditioned (Householder/SVD) fallback for (near)
    # rank-deficient Y; torch's QR path handles that case gracefully.
    eps = 1e-5 * (jnp.trace(g) / q)                       # tiny PSD jitter
    chol = jnp.linalg.cholesky(g + eps * jnp.eye(q, dtype=g.dtype))
    r_inv = solve_triangular(chol, jnp.eye(q, dtype=g.dtype), lower=True).T
    r_inv_pad = jnp.zeros((q_pad, q_pad), jnp.float32).at[:q, :q].set(r_inv)
    return matmul_ab(y, r_inv_pad, precision=_HIGHEST)    # Q, zero-padded cols


def _orthonormalize(y, q):
    # CholeskyQR2: second pass restores Householder-level orthogonality.
    return _cholesky_qr_once(_cholesky_qr_once(y, q), q)


# ----------------------------------------------------------------------------
# Randomized low-rank SVD (torch.svd_lowrank semantics, niter=2)
# ----------------------------------------------------------------------------
@functools.partial(jax.jit, static_argnames=("q", "niter"))
def svd_lowrank_pallas(a, q, key, niter=2):
    """Returns (U, S, V) with U:(m, q) -- U is the embedding."""
    m, n = a.shape
    q_pad = _round_up(max(q, 1), _LANE)
    row_tile = _pick_tile(m, _SUBLANE, _CFG["tile"])
    col_tile = _pick_tile(n, _LANE, _CFG["tile"])
    m_pad = _round_up(m, row_tile)
    n_pad = _round_up(n, col_tile)

    # Adjacency is {0,1}-valued -> bf16 storage is exact and halves HBM traffic.
    # Padded exactly once to the tile grid both kernel variants use.
    # TODO(synk): on v7x the {0,1} adjacency could stream as fp8 (exact in e4m3)
    # for another ~2x cut of the dominant HBM traffic.
    a_bf16 = jnp.pad(a.astype(jnp.bfloat16), ((0, m_pad - m), (0, n_pad - n)))

    omega = jax.random.normal(key, (n, q), dtype=jnp.float32)
    omega = jnp.pad(omega, ((0, n_pad - n), (0, q_pad - q))).astype(jnp.bfloat16)

    qmat = _orthonormalize(matmul_ab(a_bf16, omega), q)            # (m_pad, q_pad)
    for _ in range(niter):
        # TODO(synk): fuse the two adjacency passes per power iteration into one
        # sweep over A row-slabs (Z += A_i^T (A_i Q)): drops full-A HBM passes
        # from 6 to 4, but skips one re-orthonormalization (conditioning check).
        z = matmul_atb(a_bf16, qmat.astype(jnp.bfloat16))          # (n_pad, q_pad)
        qz = _orthonormalize(z, q)
        qmat = _orthonormalize(matmul_ab(a_bf16, qz.astype(jnp.bfloat16)), q)

    # B = Q^T A computed as (A^T Q)^T -> only the tiny (n, q) result is transposed.
    b = matmul_atb(a_bf16, qmat.astype(jnp.bfloat16))[:n, :q].T    # (q, n)
    u_hat, s, vh = jnp.linalg.svd(b, full_matrices=False)          # tiny, JAX glue
    u = qmat[:m, :q] @ u_hat                                       # (m, q), tiny
    return u, s, vh.T


# ----------------------------------------------------------------------------
# Module wrapper mirroring the PyTorch SVD module
# ----------------------------------------------------------------------------
class SVD:
    def __init__(self, adj_t, out_channels, key):
        # TODO(synk): original consumes a sparse COO adjacency (SpMM); densified
        # here and streamed as a dense bf16 matrix through the Pallas kernels.
        self.adj_t = jnp.asarray(adj_t, dtype=jnp.float32)
        self.out_channels = out_channels
        self._key = key
        self.reset_parameters()

    def reset_parameters(self):
        self.embedding, _, _ = svd_lowrank_pallas(
            self.adj_t, q=self.out_channels, key=self._key)

    def __call__(self, x, adj_t):
        # forward() ignores its inputs and returns the precomputed embedding.
        return self.embedding


# ----------------------------------------------------------------------------
if __name__ == "__main__":
    key = jax.random.PRNGKey(0)
    k_adj, k_x, k_probe, k_svd = jax.random.split(key, 4)

    n_nodes = 256
    out_channels = 16
    feat = 32

    # Deterministic synthetic sparse-ish symmetric adjacency (dense storage).
    dense = jax.random.uniform(k_adj, (n_nodes, n_nodes), dtype=jnp.float32)
    adj = jnp.where(dense > 0.9, 1.0, 0.0).astype(jnp.float32)
    adj = jnp.maximum(adj, adj.T)                 # symmetric, {0,1} weights

    x = jax.random.normal(k_x, (n_nodes, feat), dtype=jnp.float32)

    # Sanity check: Pallas matmul variants + Gram kernel match XLA (f32, HIGHEST).
    probe = jax.random.normal(k_probe, (n_nodes, 128), dtype=jnp.float32)
    ref_ab = jnp.dot(adj, probe, precision=_HIGHEST)
    got_ab = matmul_ab(adj, probe, precision=_HIGHEST)
    assert bool(jnp.allclose(ref_ab, got_ab, atol=1e-3, rtol=1e-3)), \
        "pallas A@B mismatch"
    ref_atb = jnp.dot(adj.T, probe, precision=_HIGHEST)
    got_atb = matmul_atb(adj, probe, precision=_HIGHEST)
    assert bool(jnp.allclose(ref_atb, got_atb, atol=1e-3, rtol=1e-3)), \
        "pallas A^T@B mismatch"
    ref_g = jnp.dot(probe.T, probe, precision=_HIGHEST)
    got_g = gram(probe)
    assert bool(jnp.allclose(ref_g, got_g, atol=1e-2, rtol=1e-3)), \
        "pallas Gram mismatch"

    module = SVD(adj, out_channels, key=k_svd)
    emb = module(x, adj)
    emb = jax.block_until_ready(emb)

    assert emb.shape == (n_nodes, out_channels)
    assert emb.dtype == jnp.float32
    assert bool(jnp.all(jnp.isfinite(emb)))
    # Left singular vectors should have (approximately) orthonormal columns.
    g = emb.T @ emb
    assert bool(jnp.allclose(g, jnp.eye(out_channels), atol=5e-2)), \
        "embedding columns not orthonormal"

    print("KERNEL_OK")
</pallas_src>

<mosaic_0001>
module attributes {stable_mosaic.version = 11 : i64} {
  func.func @_mm_kernel(%arg0: i32, %arg1: i32, %arg2: memref<256x256xf32, #tpu.memory_space<vmem>>, %arg3: memref<256x128xf32, #tpu.memory_space<vmem>>, %arg4: memref<256x128xf32, #tpu.memory_space<vmem>>) attributes {dimension_semantics = [#tpu.dimension_semantics<parallel>, #tpu.dimension_semantics<arbitrary>], iteration_bounds = array<i64: 1, 1>, scalar_prefetch = 0 : i64, scratch_operands = 0 : i64, tpu.core_type = #tpu.core_type<tc>, window_params = [{transform_indices = @transform_0, window_bounds = array<i64: 256, 256>}, {pipeline_mode = #tpu.pipeline_mode<synchronous>, transform_indices = @transform_1, window_bounds = array<i64: 256, 128>}, {transform_indices = @transform_2, window_bounds = array<i64: 256, 128>}]} {
    %c0_i32 = arith.constant 0 : i32
    %0 = arith.cmpi eq, %arg1, %c0_i32 : i32
    %1 = arith.extui %0 : i1 to i32
    %c0_i32_0 = arith.constant 0 : i32
    %2 = arith.cmpi ne, %1, %c0_i32_0 : i32
    scf.if %2 {
      %cst_7 = arith.constant 0.000000e+00 : f32
      %12 = vector.broadcast %cst_7 : f32 to vector<256x128xf32>
      %c0_8 = arith.constant 0 : index
      %c0_9 = arith.constant 0 : index
      %13 = vector.load %arg4[%c0_8, %c0_9] : memref<256x128xf32, #tpu.memory_space<vmem>>, vector<256x128xf32>
      tpu.vector_store %arg4[%c0_8, %c0_9], %12 {strides = array<i32>} : memref<256x128xf32, #tpu.memory_space<vmem>>, vector<256x128xf32>,
    } else {
    }
    %c256_i32 = arith.constant 256 : i32
    %3 = arith.muli %arg1, %c256_i32 : i32
    %4 = tpu.assume_multiple %3, 128 : i32
    %5 = arith.index_cast %4 : i32 to index
    %c0 = arith.constant 0 : index
    %6 = vector.load %arg3[%5, %c0] : memref<256x128xf32, #tpu.memory_space<vmem>>, vector<256x128xf32>
    %c0_1 = arith.constant 0 : index
    %c0_2 = arith.constant 0 : index
    %7 = vector.load %arg4[%c0_1, %c0_2] : memref<256x128xf32, #tpu.memory_space<vmem>>, vector<256x128xf32>
    %c0_3 = arith.constant 0 : index
    %c0_4 = arith.constant 0 : index
    %8 = vector.load %arg2[%c0_3, %c0_4] : memref<256x256xf32, #tpu.memory_space<vmem>>, vector<256x256xf32>
    %cst = arith.constant dense<0.000000e+00> : vector<256x128xf32>
    %9 = tpu.matmul %8, %6, %cst {dimension_numbers = #tpu.dot_dimension_numbers<[1], [0], [0], [1], [0, 0, 1, 1], [], []>, precision = #tpu.contract_precision<fp32>} : vector<256x256xf32>, vector<256x128xf32>, vector<256x128xf32> -> vector<256x128xf32>
    %10 = arith.addf %7, %9 : vector<256x128xf32>
    %c0_5 = arith.constant 0 : index
    %c0_6 = arith.constant 0 : index
    %11 = vector.load %arg4[%c0_5, %c0_6] : memref<256x128xf32, #tpu.memory_space<vmem>>, vector<256x128xf32>
    tpu.vector_store %arg4[%c0_5, %c0_6], %10 {strides = array<i32>} : memref<256x128xf32, #tpu.memory_space<vmem>>, vector<256x128xf32>,
    return
  }
  func.func @transform_0(%arg0: i32, %arg1: i32) -> (i32, i32) {
    %c0_i32 = arith.constant 0 : i32
    return %arg0, %arg1 : i32, i32
  }
  func.func @transform_1(%arg0: i32, %arg1: i32) -> (i32, i32) {
    %c0_i32 = arith.constant 0 : i32
    %c0_i32_0 = arith.constant 0 : i32
    %c0_i32_1 = arith.constant 0 : i32
    return %c0_i32, %c0_i32_0 : i32, i32
  }
  func.func @transform_2(%arg0: i32, %arg1: i32) -> (i32, i32) {
    %c0_i32 = arith.constant 0 : i32
    %c0_i32_0 = arith.constant 0 : i32
    return %arg0, %c0_i32 : i32, i32
  }
}

</mosaic_0001>

<llo_original>
// kernel: matmul_ab.1
$region0: #{matmul_ab.1}
  #allocation0 [shape = 'u32[]', space=smem, size = 0x4, offset = 0x4, fixed_abs, tag = 'smem constant byte address 0x4 - core index']
  #allocation1 [shape = 'u32[72,128]{1,0:T(1,128)}', space=vmem, size = 0x9000, scoped, tag = 'internal scratch']
  %s0 = inlined_call_operand.hbm [shape: f32[256,256], index: 0, kind: input, shape index: {}]
  %s1 = inlined_call_operand.hbm [shape: f32[256,128], index: 1, kind: input, shape index: {}]
  %s2 = inlined_call_operand.hbm [shape: f32[256,128], index: 2, kind: output, shape index: {}]
  %s3 = sld [smem:[#allocation0]]
  $region30: #{matmul_ab.1} parent=0
    _
  %s5 = ssub.s32 1, %s3
  %s6 = scalar_select 0, %s5, %s3
  $region1: #{matmul_ab.1} parent=0
    #allocation2 [shape = 'u8[262144]{0}', space=vmem, size = 0x40000, scoped, tag = 'input window, operand 0, single buffered']
    #allocation3 [shape = 's32[1]{0}', space=sflag, size = 0x4, scoped, tag = 'scoped memory for matmul_ab.1']
    #allocation4 [shape = 's32[1]{0}', space=sflag, size = 0x4, scoped, tag = 'scoped memory for matmul_ab.1']
    #allocation5 [shape = 'u8[131072]{0}', space=vmem, size = 0x20000, scoped, tag = 'input window, operand 1, single buffered']
    #allocation6 [shape = 's32[1]{0}', space=sflag, size = 0x4, scoped, tag = 'scoped memory for matmul_ab.1']
    #allocation7 [shape = 'u8[131072]{0}', space=vmem, size = 0x20000, scoped, tag = 'output window, operand 0, single buffered']
    %7 = vsyncpa [#allocation3], 0
    %8 = vsyncpa [#allocation6], 0
    %9 = vsyncpa [#allocation4], 0
    // Predicated region
    $region2: #{matmul_ab.1} parent=1 // pred_check
      _
    $region3: #{matmul_ab.1} parent=1 // pred_check_branch
      %11 = sbr.rel (0) target = $region5
    $region4: #{matmul_ab.1} parent=1 // pred_region
      %13 = vsyncadd [#allocation3], 0
      %s14 = sshll.u32 %s0, 4
      %s15 = int_to_ptr.hbm [resolvable:$true] %s14
      %s16 = sshll.u32 [#allocation2], 4
      %s17 = int_to_ptr.vmem [resolvable:$true] %s16
      %22 = dma.hbm_to_vmem [thread:$0]  %s15, 8192, %s17, [#allocation3], 256, 256, 16
    $region5: #{matmul_ab.1} parent=1 // pred_fallthru
      _
    // Predicated region
    $region6: #{matmul_ab.1} parent=1 // pred_check
      _
    $region7: #{matmul_ab.1} parent=1 // pred_check_branch
      %24 = sbr.rel (0) target = $region9
    $region8: #{matmul_ab.1} parent=1 // pred_region
      %26 = vsyncadd [#allocation6], 0
      %s27 = sshll.u32 %s1, 4
      %s28 = int_to_ptr.hbm [resolvable:$true] %s27
      %s29 = sshll.u32 [#allocation5], 4
      %s30 = int_to_ptr.vmem [resolvable:$true] %s29
      %35 = dma.hbm_to_vmem [thread:$0]  %s28, 4096, %s30, [#allocation6], 128, 128, 8
    $region9: #{matmul_ab.1} parent=1 // pred_fallthru
      _
    // Predicated region
    $region10: #{matmul_ab.1} parent=1 // pred_check
      _
    $region11: #{matmul_ab.1} parent=1 // pred_check_branch
      %37 = sbr.rel (0) target = $region13
    $region12: #{matmul_ab.1} parent=1 // pred_region
      %39 = dma.done [#allocation3], 8192
    $region13: #{matmul_ab.1} parent=1 // pred_fallthru
      _
    // Predicated region
    $region14: #{matmul_ab.1} parent=1 // pred_check
      _
    $region15: #{matmul_ab.1} parent=1 // pred_check_branch
      %41 = sbr.rel (0) target = $region17
    $region16: #{matmul_ab.1} parent=1 // pred_region
      %43 = dma.done [#allocation6], 4096
    $region17: #{matmul_ab.1} parent=1 // pred_fallthru
      _
    %p44 = scmp.eq.s32.totalorder 0, 0
    // Predicated region
    $region18: #{matmul_ab.1} parent=1 // pred_check
      %p45 = pneg %p44
    $region19: #{matmul_ab.1} parent=1 // pred_check_branch
      %47 = sbr.rel (%p45) target = $region21
    $region20: #{matmul_ab.1} parent=1 // pred_region
      %48 = vst [vmem:[#allocation7] sm:$0xff] 0.0
      %49 = vst [vmem:[#allocation7 + $0x8] sm:$0xff] 0.0
      %50 = vst [vmem:[#allocation7 + $0x10] sm:$0xff] 0.0
      %51 = vst [vmem:[#allocation7 + $0x18] sm:$0xff] 0.0
      %52 = vst [vmem:[#allocation7 + $0x20] sm:$0xff] 0.0
      %53 = vst [vmem:[#allocation7 + $0x28] sm:$0xff] 0.0
      %54 = vst [vmem:[#allocation7 + $0x30] sm:$0xff] 0.0
      %55 = vst [vmem:[#allocation7 + $0x38] sm:$0xff] 0.0
      %56 = vst [vmem:[#allocation7 + $0x40] sm:$0xff] 0.0
      %57 = vst [vmem:[#allocation7 + $0x48] sm:$0xff] 0.0
      %58 = vst [vmem:[#allocation7 + $0x50] sm:$0xff] 0.0
      %59 = vst [vmem:[#allocation7 + $0x58] sm:$0xff] 0.0
      %60 = vst [vmem:[#allocation7 + $0x60] sm:$0xff] 0.0
      %61 = vst [vmem:[#allocation7 + $0x68] sm:$0xff] 0.0
      %62 = vst [vmem:[#allocation7 + $0x70] sm:$0xff] 0.0
      %63 = vst [vmem:[#allocation7 + $0x78] sm:$0xff] 0.0
      %64 = vst [vmem:[#allocation7 + $0x80] sm:$0xff] 0.0
      %65 = vst [vmem:[#allocation7 + $0x88] sm:$0xff] 0.0
      %66 = vst [vmem:[#allocation7 + $0x90] sm:$0xff] 0.0
      %67 = vst [vmem:[#allocation7 + $0x98] sm:$0xff] 0.0
      %68 = vst [vmem:[#allocation7 + $0xa0] sm:$0xff] 0.0
      %69 = vst [vmem:[#allocation7 + $0xa8] sm:$0xff] 0.0
      %70 = vst [vmem:[#allocation7 + $0xb0] sm:$0xff] 0.0
      %71 = vst [vmem:[#allocation7 + $0xb8] sm:$0xff] 0.0
      %72 = vst [vmem:[#allocation7 + $0xc0] sm:$0xff] 0.0
      %73 = vst [vmem:[#allocation7 + $0xc8] sm:$0xff] 0.0
      %74 = vst [vmem:[#allocation7 + $0xd0] sm:$0xff] 0.0
      %75 = vst [vmem:[#allocation7 + $0xd8] sm:$0xff] 0.0
      %76 = vst [vmem:[#allocation7 + $0xe0] sm:$0xff] 0.0
      %77 = vst [vmem:[#allocation7 + $0xe8] sm:$0xff] 0.0
      %78 = vst [vmem:[#allocation7 + $0xf0] sm:$0xff] 0.0
      %79 = vst [vmem:[#allocation7 + $0xf8] sm:$0xff] 0.0
    $region21: #{matmul_ab.1} parent=1 // pred_fallthru
      _
    %s80 = smul.u32 0, 256
    %s81 = scalar_lea.vmem [#allocation5], %s80
    %v82 = vld [vmem:[%s81] sm:$0xff]
    %v83 = vld [vmem:[%s81 + $0x8] sm:$0xff]
    %v84 = vld [vmem:[%s81 + $0x10] sm:$0xff]
    %v85 = vld [vmem:[%s81 + $0x18] sm:$0xff]
    %v86 = vld [vmem:[%s81 + $0x20] sm:$0xff]
    %v87 = vld [vmem:[%s81 + $0x28] sm:$0xff]
    %v88 = vld [vmem:[%s81 + $0x30] sm:$0xff]
    %v89 = vld [vmem:[%s81 + $0x38] sm:$0xff]
    %v90 = vld [vmem:[%s81 + $0x40] sm:$0xff]
    %v91 = vld [vmem:[%s81 + $0x48] sm:$0xff]
    %v92 = vld [vmem:[%s81 + $0x50] sm:$0xff]
    %v93 = vld [vmem:[%s81 + $0x58] sm:$0xff]
    %v94 = vld [vmem:[%s81 + $0x60] sm:$0xff]
    %v95 = vld [vmem:[%s81 + $0x68] sm:$0xff]
    %v96 = vld [vmem:[%s81 + $0x70] sm:$0xff]
    %v97 = vld [vmem:[%s81 + $0x78] sm:$0xff]
    %v98 = vld [vmem:[%s81 + $0x80] sm:$0xff]
    %v99 = vld [vmem:[%s81 + $0x88] sm:$0xff]
    %v100 = vld [vmem:[%s81 + $0x90] sm:$0xff]
    %v101 = vld [vmem:[%s81 + $0x98] sm:$0xff]
    %v102 = vld [vmem:[%s81 + $0xa0] sm:$0xff]
    %v103 = vld [vmem:[%s81 + $0xa8] sm:$0xff]
    %v104 = vld [vmem:[%s81 + $0xb0] sm:$0xff]
    %v105 = vld [vmem:[%s81 + $0xb8] sm:$0xff]
    %v106 = vld [vmem:[%s81 + $0xc0] sm:$0xff]
    %v107 = vld [vmem:[%s81 + $0xc8] sm:$0xff]
    %v108 = vld [vmem:[%s81 + $0xd0] sm:$0xff]
    %v109 = vld [vmem:[%s81 + $0xd8] sm:$0xff]
    %v110 = vld [vmem:[%s81 + $0xe0] sm:$0xff]
    %v111 = vld [vmem:[%s81 + $0xe8] sm:$0xff]
    %v112 = vld [vmem:[%s81 + $0xf0] sm:$0xff]
    %v113 = vld [vmem:[%s81 + $0xf8] sm:$0xff]
    %v114 = vld [vmem:[#allocation7] sm:$0xff]
    %v115 = vld [vmem:[#allocation7 + $0x8] sm:$0xff]
    %v116 = vld [vmem:[#allocation7 + $0x10] sm:$0xff]
    %v117 = vld [vmem:[#allocation7 + $0x18] sm:$0xff]
    %v118 = vld [vmem:[#allocation7 + $0x20] sm:$0xff]
    %v119 = vld [vmem:[#allocation7 + $0x28] sm:$0xff]
    %v120 = vld [vmem:[#allocation7 + $0x30] sm:$0xff]
    %v121 = vld [vmem:[#allocation7 + $0x38] sm:$0xff]
    %v122 = vld [vmem:[#allocation7 + $0x40] sm:$0xff]
    %v123 = vld [vmem:[#allocation7 + $0x48] sm:$0xff]
    %v124 = vld [vmem:[#allocation7 + $0x50] sm:$0xff]
    %v125 = vld [vmem:[#allocation7 + $0x58] sm:$0xff]
    %v126 = vld [vmem:[#allocation7 + $0x60] sm:$0xff]
    %v127 = vld [vmem:[#allocation7 + $0x68] sm:$0xff]
    %v128 = vld [vmem:[#allocation7 + $0x70] sm:$0xff]
    %v129 = vld [vmem:[#allocation7 + $0x78] sm:$0xff]
    %v130 = vld [vmem:[#allocation7 + $0x80] sm:$0xff]
    %v131 = vld [vmem:[#allocation7 + $0x88] sm:$0xff]
    %v132 = vld [vmem:[#allocation7 + $0x90] sm:$0xff]
    %v133 = vld [vmem:[#allocation7 + $0x98] sm:$0xff]
    %v134 = vld [vmem:[#allocation7 + $0xa0] sm:$0xff]
    %v135 = vld [vmem:[#allocation7 + $0xa8] sm:$0xff]
    %v136 = vld [vmem:[#allocation7 + $0xb0] sm:$0xff]
    %v137 = vld [vmem:[#allocation7 + $0xb8] sm:$0xff]
    %v138 = vld [vmem:[#allocation7 + $0xc0] sm:$0xff]
    %v139 = vld [vmem:[#allocation7 + $0xc8] sm:$0xff]
    %v140 = vld [vmem:[#allocation7 + $0xd0] sm:$0xff]
    %v141 = vld [vmem:[#allocation7 + $0xd8] sm:$0xff]
    %v142 = vld [vmem:[#allocation7 + $0xe0] sm:$0xff]
    %v143 = vld [vmem:[#allocation7 + $0xe8] sm:$0xff]
    %v144 = vld [vmem:[#allocation7 + $0xf0] sm:$0xff]
    %v145 = vld [vmem:[#allocation7 + $0xf8] sm:$0xff]
    %v146 = vld [vmem:[#allocation2] sm:$0xff]
    %v147 = vld [vmem:[#allocation2 + $0x8] sm:$0xff]
    %v148 = vld [vmem:[#allocation2 + $0x10] sm:$0xff]
    %v149 = vld [vmem:[#allocation2 + $0x18] sm:$0xff]
    %v150 = vld [vmem:[#allocation2 + $0x20] sm:$0xff]
    %v151 = vld [vmem:[#allocation2 + $0x28] sm:$0xff]
    %v152 = vld [vmem:[#allocation2 + $0x30] sm:$0xff]
    %v153 = vld [vmem:[#allocation2 + $0x38] sm:$0xff]
    %v154 = vld [vmem:[#allocation2 + $0x40] sm:$0xff]
    %v155 = vld [vmem:[#allocation2 + $0x48] sm:$0xff]
    %v156 = vld [vmem:[#allocation2 + $0x50] sm:$0xff]
    %v157 = vld [vmem:[#allocation2 + $0x58] sm:$0xff]
    %v158 = vld [vmem:[#allocation2 + $0x60] sm:$0xff]
    %v159 = vld [vmem:[#allocation2 + $0x68] sm:$0xff]
    %v160 = vld [vmem:[#allocation2 + $0x70] sm:$0xff]
    %v161 = vld [vmem:[#allocation2 + $0x78] sm:$0xff]
    %v162 = vld [vmem:[#allocation2 + $0x80] sm:$0xff]
    %v163 = vld [vmem:[#allocation2 + $0x88] sm:$0xff]
    %v164 = vld [vmem:[#allocation2 + $0x90] sm:$0xff]
    %v165 = vld [vmem:[#allocation2 + $0x98] sm:$0xff]
    %v166 = vld [vmem:[#allocation2 + $0xa0] sm:$0xff]
    %v167 = vld [vmem:[#allocation2 + $0xa8] sm:$0xff]
    %v168 = vld [vmem:[#allocation2 + $0xb0] sm:$0xff]
    %v169 = vld [vmem:[#allocation2 + $0xb8] sm:$0xff]
    %v170 = vld [vmem:[#allocation2 + $0xc0] sm:$0xff]
    %v171 = vld [vmem:[#allocation2 + $0xc8] sm:$0xff]
    %v172 = vld [vmem:[#allocation2 + $0xd0] sm:$0xff]
    %v173 = vld [vmem:[#allocation2 + $0xd8] sm:$0xff]
    %v174 = vld [vmem:[#allocation2 + $0xe0] sm:$0xff]
    %v175 = vld [vmem:[#allocation2 + $0xe8] sm:$0xff]
    %v176 = vld [vmem:[#allocation2 + $0xf0] sm:$0xff]
    %v177 = vld [vmem:[#allocation2 + $0xf8] sm:$0xff]
    %v178 = vld [vmem:[#allocation2 + $0x100] sm:$0xff]
    %v179 = vld [vmem:[#allocation2 + $0x108] sm:$0xff]
    %v180 = vld [vmem:[#allocation2 + $0x110] sm:$0xff]
    %v181 = vld [vmem:[#allocation2 + $0x118] sm:$0xff]
    %v182 = vld [vmem:[#allocation2 + $0x120] sm:$0xff]
    %v183 = vld [vmem:[#allocation2 + $0x128] sm:$0xff]
    %v184 = vld [vmem:[#allocation2 + $0x130] sm:$0xff]
    %v185 = vld [vmem:[#allocation2 + $0x138] sm:$0xff]
    %v186 = vld [vmem:[#allocation2 + $0x140] sm:$0xff]
    %v187 = vld [vmem:[#allocation2 + $0x148] sm:$0xff]
    %v188 = vld [vmem:[#allocation2 + $0x150] sm:$0xff]
    %v189 = vld [vmem:[#allocation2 + $0x158] sm:$0xff]
    %v190 = vld [vmem:[#allocation2 + $0x160] sm:$0xff]
    %v191 = vld [vmem:[#allocation2 + $0x168] sm:$0xff]
    %v192 = vld [vmem:[#allocation2 + $0x170] sm:$0xff]
    %v193 = vld [vmem:[#allocation2 + $0x178] sm:$0xff]
    %v194 = vld [vmem:[#allocation2 + $0x180] sm:$0xff]
    %v195 = vld [vmem:[#allocation2 + $0x188] sm:$0xff]
    %v196 = vld [vmem:[#allocation2 + $0x190] sm:$0xff]
    %v197 = vld [vmem:[#allocation2 + $0x198] sm:$0xff]
    %v198 = vld [vmem:[#allocation2 + $0x1a0] sm:$0xff]
    %v199 = vld [vmem:[#allocation2 + $0x1a8] sm:$0xff]
    %v200 = vld [vmem:[#allocation2 + $0x1b0] sm:$0xff]
    %v201 = vld [vmem:[#allocation2 + $0x1b8] sm:$0xff]
    %v202 = vld [vmem:[#allocation2 + $0x1c0] sm:$0xff]
    %v203 = vld [vmem:[#allocation2 + $0x1c8] sm:$0xff]
    %v204 = vld [vmem:[#allocation2 + $0x1d0] sm:$0xff]
    %v205 = vld [vmem:[#allocation2 + $0x1d8] sm:$0xff]
    %v206 = vld [vmem:[#allocation2 + $0x1e0] sm:$0xff]
    %v207 = vld [vmem:[#allocation2 + $0x1e8] sm:$0xff]
    %v208 = vld [vmem:[#allocation2 + $0x1f0] sm:$0xff]
    %v209 = vld [vmem:[#allocation2 + $0x1f8] sm:$0xff]
    %v210 = vand.u32 %v97, 4294901760
    %211 = vmatpush.msra.mxu0 %v210
    %v212 = vand.u32 %v96, 4294901760
    %213 = vmatpush.msra.mxu0 %v212
    %v214 = vand.u32 %v95, 4294901760
    %215 = vmatpush.msra.mxu0 %v214
    %v216 = vand.u32 %v94, 4294901760
    %217 = vmatpush.msra.mxu0 %v216
    %v218 = vand.u32 %v93, 4294901760
    %219 = vmatpush.msra.mxu0 %v218
    %v220 = vand.u32 %v92, 4294901760
    %221 = vmatpush.msra.mxu0 %v220
    %v222 = vand.u32 %v91, 4294901760
    %223 = vmatpush.msra.mxu0 %v222
    %v224 = vand.u32 %v90, 4294901760
    %225 = vmatpush.msra.mxu0 %v224
    %v226 = vand.u32 %v89, 4294901760
    %227 = vmatpush.msra.mxu0 %v226
    %v228 = vand.u32 %v88, 4294901760
    %229 = vmatpush.msra.mxu0 %v228
    %v230 = vand.u32 %v87, 4294901760
    %231 = vmatpush.msra.mxu0 %v230
    %v232 = vand.u32 %v86, 4294901760
    %233 = vmatpush.msra.mxu0 %v232
    %v234 = vand.u32 %v85, 4294901760
    %235 = vmatpush.msra.mxu0 %v234
    %v236 = vand.u32 %v84, 4294901760
    %237 = vmatpush.msra.mxu0 %v236
    %v238 = vand.u32 %v83, 4294901760
    %239 = vmatpush.msra.mxu0 %v238
    %v240 = vand.u32 %v82, 4294901760
    %241 = vmatpush.msra.mxu0 %v240
    %v242 = vand.u32 %v146, 4294901760
    %v243 = vsub.f32 %v146, %v242
    %v244 = vand.u32 %v243, 4294901760
    %v245 = vsub.f32 %v243, %v244
    %v246 = vand.u32 %v245, 4294901760
    %247 = vmatmul.f32.gmra.mxu0 %v246
    %v248 = vpop.f32.mrf.mxu0
    %v249 = vadd.f32 0.0, %v248
    %v250 = vand.u32 %v148, 4294901760
    %v251 = vsub.f32 %v148, %v250
    %v252 = vand.u32 %v251, 4294901760
    %v253 = vsub.f32 %v251, %v252
    %v254 = vand.u32 %v253, 4294901760
    %255 = vmatmul.f32.gmra.mxu0 %v254
    %v256 = vpop.f32.mrf.mxu0
    %v257 = vadd.f32 0.0, %v256
    %v258 = vand.u32 %v150, 4294901760
    %v259 = vsub.f32 %v150, %v258
    %v260 = vand.u32 %v259, 4294901760
    %v261 = vsub.f32 %v259, %v260
    %v262 = vand.u32 %v261, 4294901760
    %263 = vmatmul.f32.gmra.mxu0 %v262
    %v264 = vpop.f32.mrf.mxu0
    %v265 = vadd.f32 0.0, %v264
    %v266 = vand.u32 %v152, 4294901760
    %v267 = vsub.f32 %v152, %v266
    %v268 = vand.u32 %v267, 4294901760
    %v269 = vsub.f32 %v267, %v268
    %v270 = vand.u32 %v269, 4294901760
    %271 = vmatmul.f32.gmra.mxu0 %v270
    %v272 = vpop.f32.mrf.mxu0
    %v273 = vadd.f32 0.0, %v272
    %v274 = vand.u32 %v154, 4294901760
    %v275 = vsub.f32 %v154, %v274
    %v276 = vand.u32 %v275, 4294901760
    %v277 = vsub.f32 %v275, %v276
    %v278 = vand.u32 %v277, 4294901760
    %279 = vmatmul.f32.gmra.mxu0 %v278
    %v280 = vpop.f32.mrf.mxu0
    %v281 = vadd.f32 0.0, %v280
    %v282 = vand.u32 %v156, 4294901760
    %v283 = vsub.f32 %v156, %v282
    %v284 = vand.u32 %v283, 4294901760
    %v285 = vsub.f32 %v283, %v284
    %v286 = vand.u32 %v285, 4294901760
    %287 = vmatmul.f32.gmra.mxu0 %v286
    %v288 = vpop.f32.mrf.mxu0
    %v289 = vadd.f32 0.0, %v288
    %v290 = vand.u32 %v158, 4294901760
    %v291 = vsub.f32 %v158, %v290
    %v292 = vand.u32 %v291, 4294901760
    %v293 = vsub.f32 %v291, %v292
    %v294 = vand.u32 %v293, 4294901760
    %295 = vmatmul.f32.gmra.mxu0 %v294
    %v296 = vpop.f32.mrf.mxu0
    %v297 = vadd.f32 0.0, %v296
    %v298 = vand.u32 %v160, 4294901760
    %v299 = vsub.f32 %v160, %v298
    %v300 = vand.u32 %v299, 4294901760
    %v301 = vsub.f32 %v299, %v300
    %v302 = vand.u32 %v301, 4294901760
    %303 = vmatmul.f32.gmra.mxu0 %v302
    %v304 = vpop.f32.mrf.mxu0
    %v305 = vadd.f32 0.0, %v304
    %v306 = vand.u32 %v162, 4294901760
    %v307 = vsub.f32 %v162, %v306
    %v308 = vand.u32 %v307, 4294901760
    %v309 = vsub.f32 %v307, %v308
    %v310 = vand.u32 %v309, 4294901760
    %311 = vmatmul.f32.gmra.mxu0 %v310
    %v312 = vpop.f32.mrf.mxu0
    %v313 = vadd.f32 0.0, %v312
    %v314 = vand.u32 %v164, 4294901760
    %v315 = vsub.f32 %v164, %v314
    %v316 = vand.u32 %v315, 4294901760
    %v317 = vsub.f32 %v315, %v316
    %v318 = vand.u32 %v317, 4294901760
    %319 = vmatmul.f32.gmra.mxu0 %v318
    %v320 = vpop.f32.mrf.mxu0
    %v321 = vadd.f32 0.0, %v320
    %v322 = vand.u32 %v166, 4294901760
    %v323 = vsub.f32 %v166, %v322
    %v324 = vand.u32 %v323, 4294901760
    %v325 = vsub.f32 %v323, %v324
    %v326 = vand.u32 %v325, 4294901760
    %327 = vmatmul.f32.gmra.mxu0 %v326
    %v328 = vpop.f32.mrf.mxu0
    %v329 = vadd.f32 0.0, %v328
    %v330 = vand.u32 %v168, 4294901760
    %v331 = vsub.f32 %v168, %v330
    %v332 = vand.u32 %v331, 4294901760
    %v333 = vsub.f32 %v331, %v332
    %v334 = vand.u32 %v333, 4294901760
    %335 = vmatmul.f32.gmra.mxu0 %v334
    %v336 = vpop.f32.mrf.mxu0
    %v337 = vadd.f32 0.0, %v336
    %v338 = vand.u32 %v170, 4294901760
    %v339 = vsub.f32 %v170, %v338
    %v340 = vand.u32 %v339, 4294901760
    %v341 = vsub.f32 %v339, %v340
    %v342 = vand.u32 %v341, 4294901760
    %343 = vmatmul.f32.gmra.mxu0 %v342
    %v344 = vpop.f32.mrf.mxu0
    %v345 = vadd.f32 0.0, %v344
    %v346 = vand.u32 %v172, 4294901760
    %v347 = vsub.f32 %v172, %v346
    %v348 = vand.u32 %v347, 4294901760
    %v349 = vsub.f32 %v347, %v348
    %v350 = vand.u32 %v349, 4294901760
    %351 = vmatmul.f32.gmra.mxu0 %v350
    %v352 = vpop.f32.mrf.mxu0
    %v353 = vadd.f32 0.0, %v352
    %v354 = vand.u32 %v174, 4294901760
    %v355 = vsub.f32 %v174, %v354
    %v356 = vand.u32 %v355, 4294901760
    %v357 = vsub.f32 %v355, %v356
    %v358 = vand.u32 %v357, 4294901760
    %359 = vmatmul.f32.gmra.mxu0 %v358
    %v360 = vpop.f32.mrf.mxu0
    %v361 = vadd.f32 0.0, %v360
    %v362 = vand.u32 %v176, 4294901760
    %v363 = vsub.f32 %v176, %v362
    %v364 = vand.u32 %v363, 4294901760
    %v365 = vsub.f32 %v363, %v364
    %v366 = vand.u32 %v365, 4294901760
    %367 = vmatmul.f32.gmra.mxu0 %v366
    %v368 = vpop.f32.mrf.mxu0
    %v369 = vadd.f32 0.0, %v368
    %v370 = vand.u32 %v178, 4294901760
    %v371 = vsub.f32 %v178, %v370
    %v372 = vand.u32 %v371, 4294901760
    %v373 = vsub.f32 %v371, %v372
    %v374 = vand.u32 %v373, 4294901760
    %375 = vmatmul.f32.gmra.mxu0 %v374
    %v376 = vpop.f32.mrf.mxu0
    %v377 = vadd.f32 0.0, %v376
    %v378 = vand.u32 %v180, 4294901760
    %v379 = vsub.f32 %v180, %v378
    %v380 = vand.u32 %v379, 4294901760
    %v381 = vsub.f32 %v379, %v380
    %v382 = vand.u32 %v381, 4294901760
    %383 = vmatmul.f32.gmra.mxu0 %v382
    %v384 = vpop.f32.mrf.mxu0
    %v385 = vadd.f32 0.0, %v384
    %v386 = vand.u32 %v182, 4294901760
    %v387 = vsub.f32 %v182, %v386
    %v388 = vand.u32 %v387, 4294901760
    %v389 = vsub.f32 %v387, %v388
    %v390 = vand.u32 %v389, 4294901760
    %391 = vmatmul.f32.gmra.mxu0 %v390
    %v392 = vpop.f32.mrf.mxu0
    %v393 = vadd.f32 0.0, %v392
    %v394 = vand.u32 %v184, 4294901760
    %v395 = vsub.f32 %v184, %v394
    %v396 = vand.u32 %v395, 4294901760
    %v397 = vsub.f32 %v395, %v396
    %v398 = vand.u32 %v397, 4294901760
    %399 = vmatmul.f32.gmra.mxu0 %v398
    %v400 = vpop.f32.mrf.mxu0
    %v401 = vadd.f32 0.0, %v400
    %v402 = vand.u32 %v186, 4294901760
    %v403 = vsub.f32 %v186, %v402
    %v404 = vand.u32 %v403, 4294901760
    %v405 = vsub.f32 %v403, %v404
    %v406 = vand.u32 %v405, 4294901760
    %407 = vmatmul.f32.gmra.mxu0 %v406
    %v408 = vpop.f32.mrf.mxu0
    %v409 = vadd.f32 0.0, %v408
    %v410 = vand.u32 %v188, 4294901760
    %v411 = vsub.f32 %v188, %v410
    %v412 = vand.u32 %v411, 4294901760
    %v413 = vsub.f32 %v411, %v412
    %v414 = vand.u32 %v413, 4294901760
    %415 = vmatmul.f32.gmra.mxu0 %v414
    %v416 = vpop.f32.mrf.mxu0
    %v417 = vadd.f32 0.0, %v416
    %v418 = vand.u32 %v190, 4294901760
    %v419 = vsub.f32 %v190, %v418
    %v420 = vand.u32 %v419, 4294901760
    %v421 = vsub.f32 %v419, %v420
    %v422 = vand.u32 %v421, 4294901760
    %423 = vmatmul.f32.gmra.mxu0 %v422
    %v424 = vpop.f32.mrf.mxu0
    %v425 = vadd.f32 0.0, %v424
    %v426 = vand.u32 %v192, 4294901760
    %v427 = vsub.f32 %v192, %v426
    %v428 = vand.u32 %v427, 4294901760
    %v429 = vsub.f32 %v427, %v428
    %v430 = vand.u32 %v429, 4294901760
    %431 = vmatmul.f32.gmra.mxu0 %v430
    %v432 = vpop.f32.mrf.mxu0
    %v433 = vadd.f32 0.0, %v432
    %v434 = vand.u32 %v194, 4294901760
    %v435 = vsub.f32 %v194, %v434
    %v436 = vand.u32 %v435, 4294901760
    %v437 = vsub.f32 %v435, %v436
    %v438 = vand.u32 %v437, 4294901760
    %439 = vmatmul.f32.gmra.mxu0 %v438
    %v440 = vpop.f32.mrf.mxu0
    %v441 = vadd.f32 0.0, %v440
    %v442 = vand.u32 %v196, 4294901760
    %v443 = vsub.f32 %v196, %v442
    %v444 = vand.u32 %v443, 4294901760
    %v445 = vsub.f32 %v443, %v444
    %v446 = vand.u32 %v445, 4294901760
    %447 = vmatmul.f32.gmra.mxu0 %v446
    %v448 = vpop.f32.mrf.mxu0
    %v449 = vadd.f32 0.0, %v448
    %v450 = vand.u32 %v198, 4294901760
    %v451 = vsub.f32 %v198, %v450
    %v452 = vand.u32 %v451, 4294901760
    %v453 = vsub.f32 %v451, %v452
    %v454 = vand.u32 %v453, 4294901760
    %455 = vmatmul.f32.gmra.mxu0 %v454
    %v456 = vpop.f32.mrf.mxu0
    %v457 = vadd.f32 0.0, %v456
    %v458 = vand.u32 %v200, 4294901760
    %v459 = vsub.f32 %v200, %v458
    %v460 = vand.u32 %v459, 4294901760
    %v461 = vsub.f32 %v459, %v460
    %v462 = vand.u32 %v461, 4294901760
    %463 = vmatmul.f32.gmra.mxu0 %v462
    %v464 = vpop.f32.mrf.mxu0
    %v465 = vadd.f32 0.0, %v464
    %v466 = vand.u32 %v202, 4294901760
    %v467 = vsub.f32 %v202, %v466
    %v468 = vand.u32 %v467, 4294901760
    %v469 = vsub.f32 %v467, %v468
    %v470 = vand.u32 %v469, 4294901760
    %471 = vmatmul.f32.gmra.mxu0 %v470
    %v472 = vpop.f32.mrf.mxu0
    %v473 = vadd.f32 0.0, %v472
    %v474 = vand.u32 %v204, 4294901760
    %v475 = vsub.f32 %v204, %v474
    %v476 = vand.u32 %v475, 4294901760
    %v477 = vsub.f32 %v475, %v476
    %v478 = vand.u32 %v477, 4294901760
    %479 = vmatmul.f32.gmra.mxu0 %v478
    %v480 = vpop.f32.mrf.mxu0
    %v481 = vadd.f32 0.0, %v480
    %v482 = vand.u32 %v206, 4294901760
    %v483 = vsub.f32 %v206, %v482
    %v484 = vand.u32 %v483, 4294901760
    %v485 = vsub.f32 %v483, %v484
    %v486 = vand.u32 %v485, 4294901760
    %487 = vmatmul.f32.gmra.mxu0 %v486
    %v488 = vpop.f32.mrf.mxu0
    %v489 = vadd.f32 0.0, %v488
    %v490 = vand.u32 %v208, 4294901760
    %v491 = vsub.f32 %v208, %v490
    %v492 = vand.u32 %v491, 4294901760
    %v493 = vsub.f32 %v491, %v492
    %v494 = vand.u32 %v493, 4294901760
    %495 = vmatmul.f32.gmra.mxu0 %v494
    %v496 = vpop.f32.mrf.mxu0
    %v497 = vadd.f32 0.0, %v496
    %498 = vdwg.mxu0
    %v499 = vand.u32 %v97, 4294901760
    %v500 = vsub.f32 %v97, %v499
    %v501 = vand.u32 %v500, 4294901760
    %v502 = vsub.f32 %v500, %v501
    %v503 = vand.u32 %v502, 4294901760
    %504 = vmatpush.msra.mxu0 %v503
    %v505 = vand.u32 %v96, 4294901760
    %v506 = vsub.f32 %v96, %v505
    %v507 = vand.u32 %v506, 4294901760
    %v508 = vsub.f32 %v506, %v507
    %v509 = vand.u32 %v508, 4294901760
    %510 = vmatpush.msra.mxu0 %v509
    %v511 = vand.u32 %v95, 4294901760
    %v512 = vsub.f32 %v95, %v511
    %v513 = vand.u32 %v512, 4294901760
    %v514 = vsub.f32 %v512, %v513
    %v515 = vand.u32 %v514, 4294901760
    %516 = vmatpush.msra.mxu0 %v515
    %v517 = vand.u32 %v94, 4294901760
    %v518 = vsub.f32 %v94, %v517
    %v519 = vand.u32 %v518, 4294901760
    %v520 = vsub.f32 %v518, %v519
    %v521 = vand.u32 %v520, 4294901760
    %522 = vmatpush.msra.mxu0 %v521
    %v523 = vand.u32 %v93, 4294901760
    %v524 = vsub.f32 %v93, %v523
    %v525 = vand.u32 %v524, 4294901760
    %v526 = vsub.f32 %v524, %v525
    %v527 = vand.u32 %v526, 4294901760
    %528 = vmatpush.msra.mxu0 %v527
    %v529 = vand.u32 %v92, 4294901760
    %v530 = vsub.f32 %v92, %v529
    %v531 = vand.u32 %v530, 4294901760
    %v532 = vsub.f32 %v530, %v531
    %v533 = vand.u32 %v532, 4294901760
    %534 = vmatpush.msra.mxu0 %v533
    %v535 = vand.u32 %v91, 4294901760
    %v536 = vsub.f32 %v91, %v535
    %v537 = vand.u32 %v536, 4294901760
    %v538 = vsub.f32 %v536, %v537
    %v539 = vand.u32 %v538, 4294901760
    %540 = vmatpush.msra.mxu0 %v539
    %v541 = vand.u32 %v90, 4294901760
    %v542 = vsub.f32 %v90, %v541
    %v543 = vand.u32 %v542, 4294901760
    %v544 = vsub.f32 %v542, %v543
    %v545 = vand.u32 %v544, 4294901760
    %546 = vmatpush.msra.mxu0 %v545
    %v547 = vand.u32 %v89, 4294901760
    %v548 = vsub.f32 %v89, %v547
    %v549 = vand.u32 %v548, 4294901760
    %v550 = vsub.f32 %v548, %v549
    %v551 = vand.u32 %v550, 4294901760
    %552 = vmatpush.msra.mxu0 %v551
    %v553 = vand.u32 %v88, 4294901760
    %v554 = vsub.f32 %v88, %v553
    %v555 = vand.u32 %v554, 4294901760
    %v556 = vsub.f32 %v554, %v555
    %v557 = vand.u32 %v556, 4294901760
    %558 = vmatpush.msra.mxu0 %v557
    %v559 = vand.u32 %v87, 4294901760
    %v560 = vsub.f32 %v87, %v559
    %v561 = vand.u32 %v560, 4294901760
    %v562 = vsub.f32 %v560, %v561
    %v563 = vand.u32 %v562, 4294901760
    %564 = vmatpush.msra.mxu0 %v563
    %v565 = vand.u32 %v86, 4294901760
    %v566 = vsub.f32 %v86, %v565
    %v567 = vand.u32 %v566, 4294901760
    %v568 = vsub.f32 %v566, %v567
    %v569 = vand.u32 %v568, 4294901760
    %570 = vmatpush.msra.mxu0 %v569
    %v571 = vand.u32 %v85, 4294901760
    %v572 = vsub.f32 %v85, %v571
    %v573 = vand.u32 %v572, 4294901760
    %v574 = vsub.f32 %v572, %v573
    %v575 = vand.u32 %v574, 4294901760
    %576 = vmatpush.msra.mxu0 %v575
    %v577 = vand.u32 %v84, 4294901760
    %v578 = vsub.f32 %v84, %v577
    %v579 = vand.u32 %v578, 4294901760
    %v580 = vsub.f32 %v578, %v579
    %v581 = vand.u32 %v580, 4294901760
    %582 = vmatpush.msra.mxu0 %v581
    %v583 = vand.u32 %v83, 4294901760
    %v584 = vsub.f32 %v83, %v583
    %v585 = vand.u32 %v584, 4294901760
    %v586 = vsub.f32 %v584, %v585
    %v587 = vand.u32 %v586, 4294901760
    %588 = vmatpush.msra.mxu0 %v587
    %v589 = vand.u32 %v82, 4294901760
    %v590 = vsub.f32 %v82, %v589
    %v591 = vand.u32 %v590, 4294901760
    %v592 = vsub.f32 %v590, %v591
    %v593 = vand.u32 %v592, 4294901760
    %594 = vmatpush.msra.mxu0 %v593
    %v595 = vand.u32 %v146, 4294901760
    %596 = vmatmul.f32.gmra.mxu0 %v595
    %v597 = vpop.f32.mrf.mxu0
    %v598 = vadd.f32 %v249, %v597
    %v599 = vand.u32 %v148, 4294901760
    %600 = vmatmul.f32.gmra.mxu0 %v599
    %v601 = vpop.f32.mrf.mxu0
    %v602 = vadd.f32 %v257, %v601
    %v603 = vand.u32 %v150, 4294901760
    %604 = vmatmul.f32.gmra.mxu0 %v603
    %v605 = vpop.f32.mrf.mxu0
    %v606 = vadd.f32 %v265, %v605
    %v607 = vand.u32 %v152, 4294901760
    %608 = vmatmul.f32.gmra.mxu0 %v607
    %v609 = vpop.f32.mrf.mxu0
    %v610 = vadd.f32 %v273, %v609
    %v611 = vand.u32 %v154, 4294901760
    %612 = vmatmul.f32.gmra.mxu0 %v611
    %v613 = vpop.f32.mrf.mxu0
    %v614 = vadd.f32 %v281, %v613
    %v615 = vand.u32 %v156, 4294901760
    %616 = vmatmul.f32.gmra.mxu0 %v615
    %v617 = vpop.f32.mrf.mxu0
    %v618 = vadd.f32 %v289, %v617
    %v619 = vand.u32 %v158, 4294901760
    %620 = vmatmul.f32.gmra.mxu0 %v619
    %v621 = vpop.f32.mrf.mxu0
    %v622 = vadd.f32 %v297, %v621
    %v623 = vand.u32 %v160, 4294901760
    %624 = vmatmul.f32.gmra.mxu0 %v623
    %v625 = vpop.f32.mrf.mxu0
    %v626 = vadd.f32 %v305, %v625
    %v627 = vand.u32 %v162, 4294901760
    %628 = vmatmul.f32.gmra.mxu0 %v627
    %v629 = vpop.f32.mrf.mxu0
    %v630 = vadd.f32 %v313, %v629
    %v631 = vand.u32 %v164, 4294901760
    %632 = vmatmul.f32.gmra.mxu0 %v631
    %v633 = vpop.f32.mrf.mxu0
    %v634 = vadd.f32 %v321, %v633
    %v635 = vand.u32 %v166, 4294901760
    %636 = vmatmul.f32.gmra.mxu0 %v635
    %v637 = vpop.f32.mrf.mxu0
    %v638 = vadd.f32 %v329, %v637
    %v639 = vand.u32 %v168, 4294901760
    %640 = vmatmul.f32.gmra.mxu0 %v639
    %v641 = vpop.f32.mrf.mxu0
    %v642 = vadd.f32 %v337, %v641
    %v643 = vand.u32 %v170, 4294901760
    %644 = vmatmul.f32.gmra.mxu0 %v643
    %v645 = vpop.f32.mrf.mxu0
    %v646 = vadd.f32 %v345, %v645
    %v647 = vand.u32 %v172, 4294901760
    %648 = vmatmul.f32.gmra.mxu0 %v647
    %v649 = vpop.f32.mrf.mxu0
    %v650 = vadd.f32 %v353, %v649
    %v651 = vand.u32 %v174, 4294901760
    %652 = vmatmul.f32.gmra.mxu0 %v651
    %v653 = vpop.f32.mrf.mxu0
    %v654 = vadd.f32 %v361, %v653
    %v655 = vand.u32 %v176, 4294901760
    %656 = vmatmul.f32.gmra.mxu0 %v655
    %v657 = vpop.f32.mrf.mxu0
    %v658 = vadd.f32 %v369, %v657
    %v659 = vand.u32 %v178, 4294901760
    %660 = vmatmul.f32.gmra.mxu0 %v659
    %v661 = vpop.f32.mrf.mxu0
    %v662 = vadd.f32 %v377, %v661
    %v663 = vand.u32 %v180, 4294901760
    %664 = vmatmul.f32.gmra.mxu0 %v663
    %v665 = vpop.f32.mrf.mxu0
    %v666 = vadd.f32 %v385, %v665
    %v667 = vand.u32 %v182, 4294901760
    %668 = vmatmul.f32.gmra.mxu0 %v667
    %v669 = vpop.f32.mrf.mxu0
    %v670 = vadd.f32 %v393, %v669
    %v671 = vand.u32 %v184, 4294901760
    %672 = vmatmul.f32.gmra.mxu0 %v671
    %v673 = vpop.f32.mrf.mxu0
    %v674 = vadd.f32 %v401, %v673
    %v675 = vand.u32 %v186, 4294901760
    %676 = vmatmul.f32.gmra.mxu0 %v675
    %v677 = vpop.f32.mrf.mxu0
    %v678 = vadd.f32 %v409, %v677
    %v679 = vand.u32 %v188, 4294901760
    %680 = vmatmul.f32.gmra.mxu0 %v679
    %v681 = vpop.f32.mrf.mxu0
    %v682 = vadd.f32 %v417, %v681
    %v683 = vand.u32 %v190, 4294901760
    %684 = vmatmul.f32.gmra.mxu0 %v683
    %v685 = vpop.f32.mrf.mxu0
    %v686 = vadd.f32 %v425, %v685
    %v687 = vand.u32 %v192, 4294901760
    %688 = vmatmul.f32.gmra.mxu0 %v687
    %v689 = vpop.f32.mrf.mxu0
    %v690 = vadd.f32 %v433, %v689
    %v691 = vand.u32 %v194, 4294901760
    %692 = vmatmul.f32.gmra.mxu0 %v691
    %v693 = vpop.f32.mrf.mxu0
    %v694 = vadd.f32 %v441, %v693
    %v695 = vand.u32 %v196, 4294901760
    %696 = vmatmul.f32.gmra.mxu0 %v695
    %v697 = vpop.f32.mrf.mxu0
    %v698 = vadd.f32 %v449, %v697
    %v699 = vand.u32 %v198, 4294901760
    %700 = vmatmul.f32.gmra.mxu0 %v699
    %v701 = vpop.f32.mrf.mxu0
    %v702 = vadd.f32 %v457, %v701
    %v703 = vand.u32 %v200, 4294901760
    %704 = vmatmul.f32.gmra.mxu0 %v703
    %v705 = vpop.f32.mrf.mxu0
    %v706 = vadd.f32 %v465, %v705
    %v707 = vand.u32 %v202, 4294901760
    %708 = vmatmul.f32.gmra.mxu0 %v707
    %v709 = vpop.f32.mrf.mxu0
    %v710 = vadd.f32 %v473, %v709
    %v711 = vand.u32 %v204, 4294901760
    %712 = vmatmul.f32.gmra.mxu0 %v711
    %v713 = vpop.f32.mrf.mxu0
    %v714 = vadd.f32 %v481, %v713
    %v715 = vand.u32 %v206, 4294901760
    %716 = vmatmul.f32.gmra.mxu0 %v715
    %v717 = vpop.f32.mrf.mxu0
    %v718 = vadd.f32 %v489, %v717
    %v719 = vand.u32 %v208, 4294901760
    %720 = vmatmul.f32.gmra.mxu0 %v719
    %v721 = vpop.f32.mrf.mxu0
    %v722 = vadd.f32 %v497, %v721
    %723 = vdwg.mxu0
    %v724 = vand.u32 %v97, 4294901760
    %v725 = vsub.f32 %v97, %v724
    %726 = vmatpush.msra.mxu0 %v725
    %v727 = vand.u32 %v96, 4294901760
    %v728 = vsub.f32 %v96, %v727
    %729 = vmatpush.msra.mxu0 %v728
    %v730 = vand.u32 %v95, 4294901760
    %v731 = vsub.f32 %v95, %v730
    %732 = vmatpush.msra.mxu0 %v731
    %v733 = vand.u32 %v94, 4294901760
    %v734 = vsub.f32 %v94, %v733
    %735 = vmatpush.msra.mxu0 %v734
    %v736 = vand.u32 %v93, 4294901760
    %v737 = vsub.f32 %v93, %v736
    %738 = vmatpush.msra.mxu0 %v737
    %v739 = vand.u32 %v92, 4294901760
    %v740 = vsub.f32 %v92, %v739
    %741 = vmatpush.msra.mxu0 %v740
    %v742 = vand.u32 %v91, 4294901760
    %v743 = vsub.f32 %v91, %v742
    %744 = vmatpush.msra.mxu0 %v743
    %v745 = vand.u32 %v90, 4294901760
    %v746 = vsub.f32 %v90, %v745
    %747 = vmatpush.msra.mxu0 %v746
    %v748 = vand.u32 %v89, 4294901760
    %v749 = vsub.f32 %v89, %v748
    %750 = vmatpush.msra.mxu0 %v749
    %v751 = vand.u32 %v88, 4294901760
    %v752 = vsub.f32 %v88, %v751
    %753 = vmatpush.msra.mxu0 %v752
    %v754 = vand.u32 %v87, 4294901760
    %v755 = vsub.f32 %v87, %v754
    %756 = vmatpush.msra.mxu0 %v755
    %v757 = vand.u32 %v86, 4294901760
    %v758 = vsub.f32 %v86, %v757
    %759 = vmatpush.msra.mxu0 %v758
    %v760 = vand.u32 %v85, 4294901760
    %v761 = vsub.f32 %v85, %v760
    %762 = vmatpush.msra.mxu0 %v761
    %v763 = vand.u32 %v84, 4294901760
    %v764 = vsub.f32 %v84, %v763
    %765 = vmatpush.msra.mxu0 %v764
    %v766 = vand.u32 %v83, 4294901760
    %v767 = vsub.f32 %v83, %v766
    %768 = vmatpush.msra.mxu0 %v767
    %v769 = vand.u32 %v82, 4294901760
    %v770 = vsub.f32 %v82, %v769
    %771 = vmatpush.msra.mxu0 %v770
    %v772 = vand.u32 %v146, 4294901760
    %v773 = vsub.f32 %v146, %v772
    %774 = vmatmul.f32.gmra.mxu0 %v773
    %v775 = vpop.f32.mrf.mxu0
    %v776 = vadd.f32 %v598, %v775
    %v777 = vand.u32 %v148, 4294901760
    %v778 = vsub.f32 %v148, %v777
    %779 = vmatmul.f32.gmra.mxu0 %v778
    %v780 = vpop.f32.mrf.mxu0
    %v781 = vadd.f32 %v602, %v780
    %v782 = vand.u32 %v150, 4294901760
    %v783 = vsub.f32 %v150, %v782
    %784 = vmatmul.f32.gmra.mxu0 %v783
    %v785 = vpop.f32.mrf.mxu0
    %v786 = vadd.f32 %v606, %v785
    %v787 = vand.u32 %v152, 4294901760
    %v788 = vsub.f32 %v152, %v787
    %789 = vmatmul.f32.gmra.mxu0 %v788
    %v790 = vpop.f32.mrf.mxu0
    %v791 = vadd.f32 %v610, %v790
    %v792 = vand.u32 %v154, 4294901760
    %v793 = vsub.f32 %v154, %v792
    %794 = vmatmul.f32.gmra.mxu0 %v793
    %v795 = vpop.f32.mrf.mxu0
    %v796 = vadd.f32 %v614, %v795
    %v797 = vand.u32 %v156, 4294901760
    %v798 = vsub.f32 %v156, %v797
    %799 = vmatmul.f32.gmra.mxu0 %v798
    %v800 = vpop.f32.mrf.mxu0
    %v801 = vadd.f32 %v618, %v800
    %v802 = vand.u32 %v158, 4294901760
    %v803 = vsub.f32 %v158, %v802
    %804 = vmatmul.f32.gmra.mxu0 %v803
    %v805 = vpop.f32.mrf.mxu0
    %v806 = vadd.f32 %v622, %v805
    %v807 = vand.u32 %v160, 4294901760
    %v808 = vsub.f32 %v160, %v807
    %809 = vmatmul.f32.gmra.mxu0 %v808
    %v810 = vpop.f32.mrf.mxu0
    %v811 = vadd.f32 %v626, %v810
    %v812 = vand.u32 %v162, 4294901760
    %v813 = vsub.f32 %v162, %v812
    %814 = vmatmul.f32.gmra.mxu0 %v813
    %v815 = vpop.f32.mrf.mxu0
    %v816 = vadd.f32 %v630, %v815
    %v817 = vand.u32 %v164, 4294901760
    %v818 = vsub.f32 %v164, %v817
    %819 = vmatmul.f32.gmra.mxu0 %v818
    %v820 = vpop.f32.mrf.mxu0
    %v821 = vadd.f32 %v634, %v820
    %v822 = vand.u32 %v166, 4294901760
    %v823 = vsub.f32 %v166, %v822
    %824 = vmatmul.f32.gmra.mxu0 %v823
    %v825 = vpop.f32.mrf.mxu0
    %v826 = vadd.f32 %v638, %v825
    %v827 = vand.u32 %v168, 4294901760
    %v828 = vsub.f32 %v168, %v827
    %829 = vmatmul.f32.gmra.mxu0 %v828
    %v830 = vpop.f32.mrf.mxu0
    %v831 = vadd.f32 %v642, %v830
    %v832 = vand.u32 %v170, 4294901760
    %v833 = vsub.f32 %v170, %v832
    %834 = vmatmul.f32.gmra.mxu0 %v833
    %v835 = vpop.f32.mrf.mxu0
    %v836 = vadd.f32 %v646, %v835
    %v837 = vand.u32 %v172, 4294901760
    %v838 = vsub.f32 %v172, %v837
    %839 = vmatmul.f32.gmra.mxu0 %v838
    %v840 = vpop.f32.mrf.mxu0
    %v841 = vadd.f32 %v650, %v840
    %v842 = vand.u32 %v174, 4294901760
    %v843 = vsub.f32 %v174, %v842
    %844 = vmatmul.f32.gmra.mxu0 %v843
    %v845 = vpop.f32.mrf.mxu0
    %v846 = vadd.f32 %v654, %v845
    %v847 = vand.u32 %v176, 4294901760
    %v848 = vsub.f32 %v176, %v847
    %849 = vmatmul.f32.gmra.mxu0 %v848
    %v850 = vpop.f32.mrf.mxu0
    %v851 = vadd.f32 %v658, %v850
    %v852 = vand.u32 %v178, 4294901760
    %v853 = vsub.f32 %v178, %v852
    %854 = vmatmul.f32.gmra.mxu0 %v853
    %v855 = vpop.f32.mrf.mxu0
    %v856 = vadd.f32 %v662, %v855
    %v857 = vand.u32 %v180, 4294901760
    %v858 = vsub.f32 %v180, %v857
    %859 = vmatmul.f32.gmra.mxu0 %v858
    %v860 = vpop.f32.mrf.mxu0
    %v861 = vadd.f32 %v666, %v860
    %v862 = vand.u32 %v182, 4294901760
    %v863 = vsub.f32 %v182, %v862
    %864 = vmatmul.f32.gmra.mxu0 %v863
    %v865 = vpop.f32.mrf.mxu0
    %v866 = vadd.f32 %v670, %v865
    %v867 = vand.u32 %v184, 4294901760
    %v868 = vsub.f32 %v184, %v867
    %869 = vmatmul.f32.gmra.mxu0 %v868
    %v870 = vpop.f32.mrf.mxu0
    %v871 = vadd.f32 %v674, %v870
    %v872 = vand.u32 %v186, 4294901760
    %v873 = vsub.f32 %v186, %v872
    %874 = vmatmul.f32.gmra.mxu0 %v873
    %v875 = vpop.f32.mrf.mxu0
    %v876 = vadd.f32 %v678, %v875
    %v877 = vand.u32 %v188, 4294901760
    %v878 = vsub.f32 %v188, %v877
    %879 = vmatmul.f32.gmra.mxu0 %v878
    %v880 = vpop.f32.mrf.mxu0
    %v881 = vadd.f32 %v682, %v880
    %v882 = vand.u32 %v190, 4294901760
    %v883 = vsub.f32 %v190, %v882
    %884 = vmatmul.f32.gmra.mxu0 %v883
    %v885 = vpop.f32.mrf.mxu0
    %v886 = vadd.f32 %v686, %v885
    %v887 = vand.u32 %v192, 4294901760
    %v888 = vsub.f32 %v192, %v887
    %889 = vmatmul.f32.gmra.mxu0 %v888
    %v890 = vpop.f32.mrf.mxu0
    %v891 = vadd.f32 %v690, %v890
    %v892 = vand.u32 %v194, 4294901760
    %v893 = vsub.f32 %v194, %v892
    %894 = vmatmul.f32.gmra.mxu0 %v893
    %v895 = vpop.f32.mrf.mxu0
    %v896 = vadd.f32 %v694, %v895
    %v897 = vand.u32 %v196, 4294901760
    %v898 = vsub.f32 %v196, %v897
    %899 = vmatmul.f32.gmra.mxu0 %v898
    %v900 = vpop.f32.mrf.mxu0
    %v901 = vadd.f32 %v698, %v900
    %v902 = vand.u32 %v198, 4294901760
    %v903 = vsub.f32 %v198, %v902
    %904 = vmatmul.f32.gmra.mxu0 %v903
    %v905 = vpop.f32.mrf.mxu0
    %v906 = vadd.f32 %v702, %v905
    %v907 = vand.u32 %v200, 4294901760
    %v908 = vsub.f32 %v200, %v907
    %909 = vmatmul.f32.gmra.mxu0 %v908
    %v910 = vpop.f32.mrf.mxu0
    %v911 = vadd.f32 %v706, %v910
    %v912 = vand.u32 %v202, 4294901760
    %v913 = vsub.f32 %v202, %v912
    %914 = vmatmul.f32.gmra.mxu0 %v913
    %v915 = vpop.f32.mrf.mxu0
    %v916 = vadd.f32 %v710, %v915
    %v917 = vand.u32 %v204, 4294901760
    %v918 = vsub.f32 %v204, %v917
    %919 = vmatmul.f32.gmra.mxu0 %v918
    %v920 = vpop.f32.mrf.mxu0
    %v921 = vadd.f32 %v714, %v920
    %v922 = vand.u32 %v206, 4294901760
    %v923 = vsub.f32 %v206, %v922
    %924 = vmatmul.f32.gmra.mxu0 %v923
    %v925 = vpop.f32.mrf.mxu0
    %v926 = vadd.f32 %v718, %v925
    %v927 = vand.u32 %v208, 4294901760
    %v928 = vsub.f32 %v208, %v927
    %929 = vmatmul.f32.gmra.mxu0 %v928
    %v930 = vpop.f32.mrf.mxu0
    %v931 = vadd.f32 %v722, %v930
    %932 = vdwg.mxu0
    %v933 = vand.u32 %v97, 4294901760
    %934 = vmatpush.msra.mxu0 %v933
    %v935 = vand.u32 %v96, 4294901760
    %936 = vmatpush.msra.mxu0 %v935
    %v937 = vand.u32 %v95, 4294901760
    %938 = vmatpush.msra.mxu0 %v937
    %v939 = vand.u32 %v94, 4294901760
    %940 = vmatpush.msra.mxu0 %v939
    %v941 = vand.u32 %v93, 4294901760
    %942 = vmatpush.msra.mxu0 %v941
    %v943 = vand.u32 %v92, 4294901760
    %944 = vmatpush.msra.mxu0 %v943
    %v945 = vand.u32 %v91, 4294901760
    %946 = vmatpush.msra.mxu0 %v945
    %v947 = vand.u32 %v90, 4294901760
    %948 = vmatpush.msra.mxu0 %v947
    %v949 = vand.u32 %v89, 4294901760
    %950 = vmatpush.msra.mxu0 %v949
    %v951 = vand.u32 %v88, 4294901760
    %952 = vmatpush.msra.mxu0 %v951
    %v953 = vand.u32 %v87, 4294901760
    %954 = vmatpush.msra.mxu0 %v953
    %v955 = vand.u32 %v86, 4294901760
    %956 = vmatpush.msra.mxu0 %v955
    %v957 = vand.u32 %v85, 4294901760
    %958 = vmatpush.msra.mxu0 %v957
    %v959 = vand.u32 %v84, 4294901760
    %960 = vmatpush.msra.mxu0 %v959
    %v961 = vand.u32 %v83, 4294901760
    %962 = vmatpush.msra.mxu0 %v961
    %v963 = vand.u32 %v82, 4294901760
    %964 = vmatpush.msra.mxu0 %v963
    %v965 = vand.u32 %v146, 4294901760
    %v966 = vsub.f32 %v146, %v965
    %v967 = vand.u32 %v966, 4294901760
    %968 = vmatmul.f32.gmra.mxu0 %v967
    %v969 = vpop.f32.mrf.mxu0
    %v970 = vadd.f32 %v776, %v969
    %v971 = vand.u32 %v148, 4294901760
    %v972 = vsub.f32 %v148, %v971
    %v973 = vand.u32 %v972, 4294901760
    %974 = vmatmul.f32.gmra.mxu0 %v973
    %v975 = vpop.f32.mrf.mxu0
    %v976 = vadd.f32 %v781, %v975
    %v977 = vand.u32 %v150, 4294901760
    %v978 = vsub.f32 %v150, %v977
    %v979 = vand.u32 %v978, 4294901760
    %980 = vmatmul.f32.gmra.mxu0 %v979
    %v981 = vpop.f32.mrf.mxu0
    %v982 = vadd.f32 %v786, %v981
    %v983 = vand.u32 %v152, 4294901760
    %v984 = vsub.f32 %v152, %v983
    %v985 = vand.u32 %v984, 4294901760
    %986 = vmatmul.f32.gmra.mxu0 %v985
    %v987 = vpop.f32.mrf.mxu0
    %v988 = vadd.f32 %v791, %v987
    %v989 = vand.u32 %v154, 4294901760
    %v990 = vsub.f32 %v154, %v989
    %v991 = vand.u32 %v990, 4294901760
    %992 = vmatmul.f32.gmra.mxu0 %v991
    %v993 = vpop.f32.mrf.mxu0
    %v994 = vadd.f32 %v796, %v993
    %v995 = vand.u32 %v156, 4294901760
    %v996 = vsub.f32 %v156, %v995
    %v997 = vand.u32 %v996, 4294901760
    %998 = vmatmul.f32.gmra.mxu0 %v997
    %v999 = vpop.f32.mrf.mxu0
    %v1000 = vadd.f32 %v801, %v999
    %v1001 = vand.u32 %v158, 4294901760
    %v1002 = vsub.f32 %v158, %v1001
    %v1003 = vand.u32 %v1002, 4294901760
    %1004 = vmatmul.f32.gmra.mxu0 %v1003
    %v1005 = vpop.f32.mrf.mxu0
    %v1006 = vadd.f32 %v806, %v1005
    %v1007 = vand.u32 %v160, 4294901760
    %v1008 = vsub.f32 %v160, %v1007
    %v1009 = vand.u32 %v1008, 4294901760
    %1010 = vmatmul.f32.gmra.mxu0 %v1009
    %v1011 = vpop.f32.mrf.mxu0
    %v1012 = vadd.f32 %v811, %v1011
    %v1013 = vand.u32 %v162, 4294901760
    %v1014 = vsub.f32 %v162, %v1013
    %v1015 = vand.u32 %v1014, 4294901760
    %1016 = vmatmul.f32.gmra.mxu0 %v1015
    %v1017 = vpop.f32.mrf.mxu0
    %v1018 = vadd.f32 %v816, %v1017
    %v1019 = vand.u32 %v164, 4294901760
    %v1020 = vsub.f32 %v164, %v1019
    %v1021 = vand.u32 %v1020, 4294901760
    %1022 = vmatmul.f32.gmra.mxu0 %v1021
    %v1023 = vpop.f32.mrf.mxu0
    %v1024 = vadd.f32 %v821, %v1023
    %v1025 = vand.u32 %v166, 4294901760
    %v1026 = vsub.f32 %v166, %v1025
    %v1027 = vand.u32 %v1026, 4294901760
    %1028 = vmatmul.f32.gmra.mxu0 %v1027
    %v1029 = vpop.f32.mrf.mxu0
    %v1030 = vadd.f32 %v826, %v1029
    %v1031 = vand.u32 %v168, 4294901760
    %v1032 = vsub.f32 %v168, %v1031
    %v1033 = vand.u32 %v1032, 4294901760
    %1034 = vmatmul.f32.gmra.mxu0 %v1033
    %v1035 = vpop.f32.mrf.mxu0
    %v1036 = vadd.f32 %v831, %v1035
    %v1037 = vand.u32 %v170, 4294901760
    %v1038 = vsub.f32 %v170, %v1037
    %v1039 = vand.u32 %v1038, 4294901760
    %1040 = vmatmul.f32.gmra.mxu0 %v1039
    %v1041 = vpop.f32.mrf.mxu0
    %v1042 = vadd.f32 %v836, %v1041
    %v1043 = vand.u32 %v172, 4294901760
    %v1044 = vsub.f32 %v172, %v1043
    %v1045 = vand.u32 %v1044, 4294901760
    %1046 = vmatmul.f32.gmra.mxu0 %v1045
    %v1047 = vpop.f32.mrf.mxu0
    %v1048 = vadd.f32 %v841, %v1047
    %v1049 = vand.u32 %v174, 4294901760
    %v1050 = vsub.f32 %v174, %v1049
    %v1051 = vand.u32 %v1050, 4294901760
    %1052 = vmatmul.f32.gmra.mxu0 %v1051
    %v1053 = vpop.f32.mrf.mxu0
    %v1054 = vadd.f32 %v846, %v1053
    %v1055 = vand.u32 %v176, 4294901760
    %v1056 = vsub.f32 %v176, %v1055
    %v1057 = vand.u32 %v1056, 4294901760
    %1058 = vmatmul.f32.gmra.mxu0 %v1057
    %v1059 = vpop.f32.mrf.mxu0
    %v1060 = vadd.f32 %v851, %v1059
    %v1061 = vand.u32 %v178, 4294901760
    %v1062 = vsub.f32 %v178, %v1061
    %v1063 = vand.u32 %v1062, 4294901760
    %1064 = vmatmul.f32.gmra.mxu0 %v1063
    %v1065 = vpop.f32.mrf.mxu0
    %v1066 = vadd.f32 %v856, %v1065
    %v1067 = vand.u32 %v180, 4294901760
    %v1068 = vsub.f32 %v180, %v1067
    %v1069 = vand.u32 %v1068, 4294901760
    %1070 = vmatmul.f32.gmra.mxu0 %v1069
    %v1071 = vpop.f32.mrf.mxu0
    %v1072 = vadd.f32 %v861, %v1071
    %v1073 = vand.u32 %v182, 4294901760
    %v1074 = vsub.f32 %v182, %v1073
    %v1075 = vand.u32 %v1074, 4294901760
    %1076 = vmatmul.f32.gmra.mxu0 %v1075
    %v1077 = vpop.f32.mrf.mxu0
    %v1078 = vadd.f32 %v866, %v1077
    %v1079 = vand.u32 %v184, 4294901760
    %v1080 = vsub.f32 %v184, %v1079
    %v1081 = vand.u32 %v1080, 4294901760
    %1082 = vmatmul.f32.gmra.mxu0 %v1081
    %v1083 = vpop.f32.mrf.mxu0
    %v1084 = vadd.f32 %v871, %v1083
    %v1085 = vand.u32 %v186, 4294901760
    %v1086 = vsub.f32 %v186, %v1085
    %v1087 = vand.u32 %v1086, 4294901760
    %1088 = vmatmul.f32.gmra.mxu0 %v1087
    %v1089 = vpop.f32.mrf.mxu0
    %v1090 = vadd.f32 %v876, %v1089
    %v1091 = vand.u32 %v188, 4294901760
    %v1092 = vsub.f32 %v188, %v1091
    %v1093 = vand.u32 %v1092, 4294901760
    %1094 = vmatmul.f32.gmra.mxu0 %v1093
    %v1095 = vpop.f32.mrf.mxu0
    %v1096 = vadd.f32 %v881, %v1095
    %v1097 = vand.u32 %v190, 4294901760
    %v1098 = vsub.f32 %v190, %v1097
    %v1099 = vand.u32 %v1098, 4294901760
    %1100 = vmatmul.f32.gmra.mxu0 %v1099
    %v1101 = vpop.f32.mrf.mxu0
    %v1102 = vadd.f32 %v886, %v1101
    %v1103 = vand.u32 %v192, 4294901760
    %v1104 = vsub.f32 %v192, %v1103
    %v1105 = vand.u32 %v1104, 4294901760
    %1106 = vmatmul.f32.gmra.mxu0 %v1105
    %v1107 = vpop.f32.mrf.mxu0
    %v1108 = vadd.f32 %v891, %v1107
    %v1109 = vand.u32 %v194, 4294901760
    %v1110 = vsub.f32 %v194, %v1109
    %v1111 = vand.u32 %v1110, 4294901760
    %1112 = vmatmul.f32.gmra.mxu0 %v1111
    %v1113 = vpop.f32.mrf.mxu0
    %v1114 = vadd.f32 %v896, %v1113
    %v1115 = vand.u32 %v196, 4294901760
    %v1116 = vsub.f32 %v196, %v1115
    %v1117 = vand.u32 %v1116, 4294901760
    %1118 = vmatmul.f32.gmra.mxu0 %v1117
    %v1119 = vpop.f32.mrf.mxu0
    %v1120 = vadd.f32 %v901, %v1119
    %v1121 = vand.u32 %v198, 4294901760
    %v1122 = vsub.f32 %v198, %v1121
    %v1123 = vand.u32 %v1122, 4294901760
    %1124 = vmatmul.f32.gmra.mxu0 %v1123
    %v1125 = vpop.f32.mrf.mxu0
    %v1126 = vadd.f32 %v906, %v1125
    %v1127 = vand.u32 %v200, 4294901760
    %v1128 = vsub.f32 %v200, %v1127
    %v1129 = vand.u32 %v1128, 4294901760
    %1130 = vmatmul.f32.gmra.mxu0 %v1129
    %v1131 = vpop.f32.mrf.mxu0
    %v1132 = vadd.f32 %v911, %v1131
    %v1133 = vand.u32 %v202, 4294901760
    %v1134 = vsub.f32 %v202, %v1133
    %v1135 = vand.u32 %v1134, 4294901760
    %1136 = vmatmul.f32.gmra.mxu0 %v1135
    %v1137 = vpop.f32.mrf.mxu0
    %v1138 = vadd.f32 %v916, %v1137
    %v1139 = vand.u32 %v204, 4294901760
    %v1140 = vsub.f32 %v204, %v1139
    %v1141 = vand.u32 %v1140, 4294901760
    %1142 = vmatmul.f32.gmra.mxu0 %v1141
    %v1143 = vpop.f32.mrf.mxu0
    %v1144 = vadd.f32 %v921, %v1143
    %v1145 = vand.u32 %v206, 4294901760
    %v1146 = vsub.f32 %v206, %v1145
    %v1147 = vand.u32 %v1146, 4294901760
    %1148 = vmatmul.f32.gmra.mxu0 %v1147
    %v1149 = vpop.f32.mrf.mxu0
    %v1150 = vadd.f32 %v926, %v1149
    %v1151 = vand.u32 %v208, 4294901760
    %v1152 = vsub.f32 %v208, %v1151
    %v1153 = vand.u32 %v1152, 4294901760
    %1154 = vmatmul.f32.gmra.mxu0 %v1153
    %v1155 = vpop.f32.mrf.mxu0
    %v1156 = vadd.f32 %v931, %v1155
    %1157 = vdwg.mxu0
    %v1158 = vand.u32 %v97, 4294901760
    %v1159 = vsub.f32 %v97, %v1158
    %v1160 = vand.u32 %v1159, 4294901760
    %1161 = vmatpush.msra.mxu0 %v1160
    %v1162 = vand.u32 %v96, 4294901760
    %v1163 = vsub.f32 %v96, %v1162
    %v1164 = vand.u32 %v1163, 4294901760
    %1165 = vmatpush.msra.mxu0 %v1164
    %v1166 = vand.u32 %v95, 4294901760
    %v1167 = vsub.f32 %v95, %v1166
    %v1168 = vand.u32 %v1167, 4294901760
    %1169 = vmatpush.msra.mxu0 %v1168
    %v1170 = vand.u32 %v94, 4294901760
    %v1171 = vsub.f32 %v94, %v1170
    %v1172 = vand.u32 %v1171, 4294901760
    %1173 = vmatpush.msra.mxu0 %v1172
    %v1174 = vand.u32 %v93, 4294901760
    %v1175 = vsub.f32 %v93, %v1174
    %v1176 = vand.u32 %v1175, 4294901760
    %1177 = vmatpush.msra.mxu0 %v1176
    %v1178 = vand.u32 %v92, 4294901760
    %v1179 = vsub.f32 %v92, %v1178
    %v1180 = vand.u32 %v1179, 4294901760
    %1181 = vmatpush.msra.mxu0 %v1180
    %v1182 = vand.u32 %v91, 4294901760
    %v1183 = vsub.f32 %v91, %v1182
    %v1184 = vand.u32 %v1183, 4294901760
    %1185 = vmatpush.msra.mxu0 %v1184
    %v1186 = vand.u32 %v90, 4294901760
    %v1187 = vsub.f32 %v90, %v1186
    %v1188 = vand.u32 %v1187, 4294901760
    %1189 = vmatpush.msra.mxu0 %v1188
    %v1190 = vand.u32 %v89, 4294901760
    %v1191 = vsub.f32 %v89, %v1190
    %v1192 = vand.u32 %v1191, 4294901760
    %1193 = vmatpush.msra.mxu0 %v1192
    %v1194 = vand.u32 %v88, 4294901760
    %v1195 = vsub.f32 %v88, %v1194
    %v1196 = vand.u32 %v1195, 4294901760
    %1197 = vmatpush.msra.mxu0 %v1196
    %v1198 = vand.u32 %v87, 4294901760
    %v1199 = vsub.f32 %v87, %v1198
    %v1200 = vand.u32 %v1199, 4294901760
    %1201 = vmatpush.msra.mxu0 %v1200
    %v1202 = vand.u32 %v86, 4294901760
    %v1203 = vsub.f32 %v86, %v1202
    %v1204 = vand.u32 %v1203, 4294901760
    %1205 = vmatpush.msra.mxu0 %v1204
    %v1206 = vand.u32 %v85, 4294901760
    %v1207 = vsub.f32 %v85, %v1206
    %v1208 = vand.u32 %v1207, 4294901760
    %1209 = vmatpush.msra.mxu0 %v1208
    %v1210 = vand.u32 %v84, 4294901760
    %v1211 = vsub.f32 %v84, %v1210
    %v1212 = vand.u32 %v1211, 4294901760
    %1213 = vmatpush.msra.mxu0 %v1212
    %v1214 = vand.u32 %v83, 4294901760
    %v1215 = vsub.f32 %v83, %v1214
    %v1216 = vand.u32 %v1215, 4294901760
    %1217 = vmatpush.msra.mxu0 %v1216
    %v1218 = vand.u32 %v82, 4294901760
    %v1219 = vsub.f32 %v82, %v1218
    %v1220 = vand.u32 %v1219, 4294901760
    %1221 = vmatpush.msra.mxu0 %v1220
    %v1222 = vand.u32 %v146, 4294901760
    %1223 = vmatmul.f32.gmra.mxu0 %v1222
    %v1224 = vpop.f32.mrf.mxu0
    %v1225 = vadd.f32 %v970, %v1224
    %v1226 = vand.u32 %v148, 4294901760
    %1227 = vmatmul.f32.gmra.mxu0 %v1226
    %v1228 = vpop.f32.mrf.mxu0
    %v1229 = vadd.f32 %v976, %v1228
    %v1230 = vand.u32 %v150, 4294901760
    %1231 = vmatmul.f32.gmra.mxu0 %v1230
    %v1232 = vpop.f32.mrf.mxu0
    %v1233 = vadd.f32 %v982, %v1232
    %v1234 = vand.u32 %v152, 4294901760
    %1235 = vmatmul.f32.gmra.mxu0 %v1234
    %v1236 = vpop.f32.mrf.mxu0
    %v1237 = vadd.f32 %v988, %v1236
    %v1238 = vand.u32 %v154, 4294901760
    %1239 = vmatmul.f32.gmra.mxu0 %v1238
    %v1240 = vpop.f32.mrf.mxu0
    %v1241 = vadd.f32 %v994, %v1240
    %v1242 = vand.u32 %v156, 4294901760
    %1243 = vmatmul.f32.gmra.mxu0 %v1242
    %v1244 = vpop.f32.mrf.mxu0
    %v1245 = vadd.f32 %v1000, %v1244
    %v1246 = vand.u32 %v158, 4294901760
    %1247 = vmatmul.f32.gmra.mxu0 %v1246
    %v1248 = vpop.f32.mrf.mxu0
    %v1249 = vadd.f32 %v1006, %v1248
    %v1250 = vand.u32 %v160, 4294901760
    %1251 = vmatmul.f32.gmra.mxu0 %v1250
    %v1252 = vpop.f32.mrf.mxu0
    %v1253 = vadd.f32 %v1012, %v1252
    %v1254 = vand.u32 %v162, 4294901760
    %1255 = vmatmul.f32.gmra.mxu0 %v1254
    %v1256 = vpop.f32.mrf.mxu0
    %v1257 = vadd.f32 %v1018, %v1256
    %v1258 = vand.u32 %v164, 4294901760
    %1259 = vmatmul.f32.gmra.mxu0 %v1258
    %v1260 = vpop.f32.mrf.mxu0
    %v1261 = vadd.f32 %v1024, %v1260
    %v1262 = vand.u32 %v166, 4294901760
    %1263 = vmatmul.f32.gmra.mxu0 %v1262
    %v1264 = vpop.f32.mrf.mxu0
    %v1265 = vadd.f32 %v1030, %v1264
    %v1266 = vand.u32 %v168, 4294901760
    %1267 = vmatmul.f32.gmra.mxu0 %v1266
    %v1268 = vpop.f32.mrf.mxu0
    %v1269 = vadd.f32 %v1036, %v1268
    %v1270 = vand.u32 %v170, 4294901760
    %1271 = vmatmul.f32.gmra.mxu0 %v1270
    %v1272 = vpop.f32.mrf.mxu0
    %v1273 = vadd.f32 %v1042, %v1272
    %v1274 = vand.u32 %v172, 4294901760
    %1275 = vmatmul.f32.gmra.mxu0 %v1274
    %v1276 = vpop.f32.mrf.mxu0
    %v1277 = vadd.f32 %v1048, %v1276
    %v1278 = vand.u32 %v174, 4294901760
    %1279 = vmatmul.f32.gmra.mxu0 %v1278
    %v1280 = vpop.f32.mrf.mxu0
    %v1281 = vadd.f32 %v1054, %v1280
    %v1282 = vand.u32 %v176, 4294901760
    %1283 = vmatmul.f32.gmra.mxu0 %v1282
    %v1284 = vpop.f32.mrf.mxu0
    %v1285 = vadd.f32 %v1060, %v1284
    %v1286 = vand.u32 %v178, 4294901760
    %1287 = vmatmul.f32.gmra.mxu0 %v1286
    %v1288 = vpop.f32.mrf.mxu0
    %v1289 = vadd.f32 %v1066, %v1288
    %v1290 = vand.u32 %v180, 4294901760
    %1291 = vmatmul.f32.gmra.mxu0 %v1290
    %v1292 = vpop.f32.mrf.mxu0
    %v1293 = vadd.f32 %v1072, %v1292
    %v1294 = vand.u32 %v182, 4294901760
    %1295 = vmatmul.f32.gmra.mxu0 %v1294
    %v1296 = vpop.f32.mrf.mxu0
    %v1297 = vadd.f32 %v1078, %v1296
    %v1298 = vand.u32 %v184, 4294901760
    %1299 = vmatmul.f32.gmra.mxu0 %v1298
    %v1300 = vpop.f32.mrf.mxu0
    %v1301 = vadd.f32 %v1084, %v1300
    %v1302 = vand.u32 %v186, 4294901760
    %1303 = vmatmul.f32.gmra.mxu0 %v1302
    %v1304 = vpop.f32.mrf.mxu0
    %v1305 = vadd.f32 %v1090, %v1304
    %v1306 = vand.u32 %v188, 4294901760
    %1307 = vmatmul.f32.gmra.mxu0 %v1306
    %v1308 = vpop.f32.mrf.mxu0
    %v1309 = vadd.f32 %v1096, %v1308
    %v1310 = vand.u32 %v190, 4294901760
    %1311 = vmatmul.f32.gmra.mxu0 %v1310
    %v1312 = vpop.f32.mrf.mxu0
    %v1313 = vadd.f32 %v1102, %v1312
    %v1314 = vand.u32 %v192, 4294901760
    %1315 = vmatmul.f32.gmra.mxu0 %v1314
    %v1316 = vpop.f32.mrf.mxu0
    %v1317 = vadd.f32 %v1108, %v1316
    %v1318 = vand.u32 %v194, 4294901760
    %1319 = vmatmul.f32.gmra.mxu0 %v1318
    %v1320 = vpop.f32.mrf.mxu0
    %v1321 = vadd.f32 %v1114, %v1320
    %v1322 = vand.u32 %v196, 4294901760
    %1323 = vmatmul.f32.gmra.mxu0 %v1322
    %v1324 = vpop.f32.mrf.mxu0
    %v1325 = vadd.f32 %v1120, %v1324
    %v1326 = vand.u32 %v198, 4294901760
    %1327 = vmatmul.f32.gmra.mxu0 %v1326
    %v1328 = vpop.f32.mrf.mxu0
    %v1329 = vadd.f32 %v1126, %v1328
    %v1330 = vand.u32 %v200, 4294901760
    %1331 = vmatmul.f32.gmra.mxu0 %v1330
    %v1332 = vpop.f32.mrf.mxu0
    %v1333 = vadd.f32 %v1132, %v1332
    %v1334 = vand.u32 %v202, 4294901760
    %1335 = vmatmul.f32.gmra.mxu0 %v1334
    %v1336 = vpop.f32.mrf.mxu0
    %v1337 = vadd.f32 %v1138, %v1336
    %v1338 = vand.u32 %v204, 4294901760
    %1339 = vmatmul.f32.gmra.mxu0 %v1338
    %v1340 = vpop.f32.mrf.mxu0
    %v1341 = vadd.f32 %v1144, %v1340
    %v1342 = vand.u32 %v206, 4294901760
    %1343 = vmatmul.f32.gmra.mxu0 %v1342
    %v1344 = vpop.f32.mrf.mxu0
    %v1345 = vadd.f32 %v1150, %v1344
    %v1346 = vand.u32 %v208, 4294901760
    %1347 = vmatmul.f32.gmra.mxu0 %v1346
    %v1348 = vpop.f32.mrf.mxu0
    %v1349 = vadd.f32 %v1156, %v1348
    %1350 = vdwg.mxu0
    %v1351 = vand.u32 %v97, 4294901760
    %1352 = vmatpush.msra.mxu0 %v1351
    %v1353 = vand.u32 %v96, 4294901760
    %1354 = vmatpush.msra.mxu0 %v1353
    %v1355 = vand.u32 %v95, 4294901760
    %1356 = vmatpush.msra.mxu0 %v1355
    %v1357 = vand.u32 %v94, 4294901760
    %1358 = vmatpush.msra.mxu0 %v1357
    %v1359 = vand.u32 %v93, 4294901760
    %1360 = vmatpush.msra.mxu0 %v1359
    %v1361 = vand.u32 %v92, 4294901760
    %1362 = vmatpush.msra.mxu0 %v1361
    %v1363 = vand.u32 %v91, 4294901760
    %1364 = vmatpush.msra.mxu0 %v1363
    %v1365 = vand.u32 %v90, 4294901760
    %1366 = vmatpush.msra.mxu0 %v1365
    %v1367 = vand.u32 %v89, 4294901760
    %1368 = vmatpush.msra.mxu0 %v1367
    %v1369 = vand.u32 %v88, 4294901760
    %1370 = vmatpush.msra.mxu0 %v1369
    %v1371 = vand.u32 %v87, 4294901760
    %1372 = vmatpush.msra.mxu0 %v1371
    %v1373 = vand.u32 %v86, 4294901760
    %1374 = vmatpush.msra.mxu0 %v1373
    %v1375 = vand.u32 %v85, 4294901760
    %1376 = vmatpush.msra.mxu0 %v1375
    %v1377 = vand.u32 %v84, 4294901760
    %1378 = vmatpush.msra.mxu0 %v1377
    %v1379 = vand.u32 %v83, 4294901760
    %1380 = vmatpush.msra.mxu0 %v1379
    %v1381 = vand.u32 %v82, 4294901760
    %1382 = vmatpush.msra.mxu0 %v1381
    %v1383 = vand.u32 %v146, 4294901760
    %1384 = vmatmul.f32.gmra.mxu0 %v1383
    %v1385 = vpop.f32.mrf.mxu0
    %v1386 = vadd.f32 %v1225, %v1385
    %v1387 = vand.u32 %v148, 4294901760
    %1388 = vmatmul.f32.gmra.mxu0 %v1387
    %v1389 = vpop.f32.mrf.mxu0
    %v1390 = vadd.f32 %v1229, %v1389
    %v1391 = vand.u32 %v150, 4294901760
    %1392 = vmatmul.f32.gmra.mxu0 %v1391
    %v1393 = vpop.f32.mrf.mxu0
    %v1394 = vadd.f32 %v1233, %v1393
    %v1395 = vand.u32 %v152, 4294901760
    %1396 = vmatmul.f32.gmra.mxu0 %v1395
    %v1397 = vpop.f32.mrf.mxu0
    %v1398 = vadd.f32 %v1237, %v1397
    %v1399 = vand.u32 %v154, 4294901760
    %1400 = vmatmul.f32.gmra.mxu0 %v1399
    %v1401 = vpop.f32.mrf.mxu0
    %v1402 = vadd.f32 %v1241, %v1401
    %v1403 = vand.u32 %v156, 4294901760
    %1404 = vmatmul.f32.gmra.mxu0 %v1403
    %v1405 = vpop.f32.mrf.mxu0
    %v1406 = vadd.f32 %v1245, %v1405
    %v1407 = vand.u32 %v158, 4294901760
    %1408 = vmatmul.f32.gmra.mxu0 %v1407
    %v1409 = vpop.f32.mrf.mxu0
    %v1410 = vadd.f32 %v1249, %v1409
    %v1411 = vand.u32 %v160, 4294901760
    %1412 = vmatmul.f32.gmra.mxu0 %v1411
    %v1413 = vpop.f32.mrf.mxu0
    %v1414 = vadd.f32 %v1253, %v1413
    %v1415 = vand.u32 %v162, 4294901760
    %1416 = vmatmul.f32.gmra.mxu0 %v1415
    %v1417 = vpop.f32.mrf.mxu0
    %v1418 = vadd.f32 %v1257, %v1417
    %v1419 = vand.u32 %v164, 4294901760
    %1420 = vmatmul.f32.gmra.mxu0 %v1419
    %v1421 = vpop.f32.mrf.mxu0
    %v1422 = vadd.f32 %v1261, %v1421
    %v1423 = vand.u32 %v166, 4294901760
    %1424 = vmatmul.f32.gmra.mxu0 %v1423
    %v1425 = vpop.f32.mrf.mxu0
    %v1426 = vadd.f32 %v1265, %v1425
    %v1427 = vand.u32 %v168, 4294901760
    %1428 = vmatmul.f32.gmra.mxu0 %v1427
    %v1429 = vpop.f32.mrf.mxu0
    %v1430 = vadd.f32 %v1269, %v1429
    %v1431 = vand.u32 %v170, 4294901760
    %1432 = vmatmul.f32.gmra.mxu0 %v1431
    %v1433 = vpop.f32.mrf.mxu0
    %v1434 = vadd.f32 %v1273, %v1433
    %v1435 = vand.u32 %v172, 4294901760
    %1436 = vmatmul.f32.gmra.mxu0 %v1435
    %v1437 = vpop.f32.mrf.mxu0
    %v1438 = vadd.f32 %v1277, %v1437
    %v1439 = vand.u32 %v174, 4294901760
    %1440 = vmatmul.f32.gmra.mxu0 %v1439
    %v1441 = vpop.f32.mrf.mxu0
    %v1442 = vadd.f32 %v1281, %v1441
    %v1443 = vand.u32 %v176, 4294901760
    %1444 = vmatmul.f32.gmra.mxu0 %v1443
    %v1445 = vpop.f32.mrf.mxu0
    %v1446 = vadd.f32 %v1285, %v1445
    %v1447 = vand.u32 %v178, 4294901760
    %1448 = vmatmul.f32.gmra.mxu0 %v1447
    %v1449 = vpop.f32.mrf.mxu0
    %v1450 = vadd.f32 %v1289, %v1449
    %v1451 = vand.u32 %v180, 4294901760
    %1452 = vmatmul.f32.gmra.mxu0 %v1451
    %v1453 = vpop.f32.mrf.mxu0
    %v1454 = vadd.f32 %v1293, %v1453
    %v1455 = vand.u32 %v182, 4294901760
    %1456 = vmatmul.f32.gmra.mxu0 %v1455
    %v1457 = vpop.f32.mrf.mxu0
    %v1458 = vadd.f32 %v1297, %v1457
    %v1459 = vand.u32 %v184, 4294901760
    %1460 = vmatmul.f32.gmra.mxu0 %v1459
    %v1461 = vpop.f32.mrf.mxu0
    %v1462 = vadd.f32 %v1301, %v1461
    %v1463 = vand.u32 %v186, 4294901760
    %1464 = vmatmul.f32.gmra.mxu0 %v1463
    %v1465 = vpop.f32.mrf.mxu0
    %v1466 = vadd.f32 %v1305, %v1465
    %v1467 = vand.u32 %v188, 4294901760
    %1468 = vmatmul.f32.gmra.mxu0 %v1467
    %v1469 = vpop.f32.mrf.mxu0
    %v1470 = vadd.f32 %v1309, %v1469
    %v1471 = vand.u32 %v190, 4294901760
    %1472 = vmatmul.f32.gmra.mxu0 %v1471
    %v1473 = vpop.f32.mrf.mxu0
    %v1474 = vadd.f32 %v1313, %v1473
    %v1475 = vand.u32 %v192, 4294901760
    %1476 = vmatmul.f32.gmra.mxu0 %v1475
    %v1477 = vpop.f32.mrf.mxu0
    %v1478 = vadd.f32 %v1317, %v1477
    %v1479 = vand.u32 %v194, 4294901760
    %1480 = vmatmul.f32.gmra.mxu0 %v1479
    %v1481 = vpop.f32.mrf.mxu0
    %v1482 = vadd.f32 %v1321, %v1481
    %v1483 = vand.u32 %v196, 4294901760
    %1484 = vmatmul.f32.gmra.mxu0 %v1483
    %v1485 = vpop.f32.mrf.mxu0
    %v1486 = vadd.f32 %v1325, %v1485
    %v1487 = vand.u32 %v198, 4294901760
    %1488 = vmatmul.f32.gmra.mxu0 %v1487
    %v1489 = vpop.f32.mrf.mxu0
    %v1490 = vadd.f32 %v1329, %v1489
    %v1491 = vand.u32 %v200, 4294901760
    %1492 = vmatmul.f32.gmra.mxu0 %v1491
    %v1493 = vpop.f32.mrf.mxu0
    %v1494 = vadd.f32 %v1333, %v1493
    %v1495 = vand.u32 %v202, 4294901760
    %1496 = vmatmul.f32.gmra.mxu0 %v1495
    %v1497 = vpop.f32.mrf.mxu0
    %v1498 = vadd.f32 %v1337, %v1497
    %v1499 = vand.u32 %v204, 4294901760
    %1500 = vmatmul.f32.gmra.mxu0 %v1499
    %v1501 = vpop.f32.mrf.mxu0
    %v1502 = vadd.f32 %v1341, %v1501
    %v1503 = vand.u32 %v206, 4294901760
    %1504 = vmatmul.f32.gmra.mxu0 %v1503
    %v1505 = vpop.f32.mrf.mxu0
    %v1506 = vadd.f32 %v1345, %v1505
    %v1507 = vand.u32 %v208, 4294901760
    %1508 = vmatmul.f32.gmra.mxu0 %v1507
    %v1509 = vpop.f32.mrf.mxu0
    %v1510 = vadd.f32 %v1349, %v1509
    %1511 = vdwg.mxu0
    %v1512 = vand.u32 %v113, 4294901760
    %1513 = vmatpush.msra.mxu0 %v1512
    %v1514 = vand.u32 %v112, 4294901760
    %1515 = vmatpush.msra.mxu0 %v1514
    %v1516 = vand.u32 %v111, 4294901760
    %1517 = vmatpush.msra.mxu0 %v1516
    %v1518 = vand.u32 %v110, 4294901760
    %1519 = vmatpush.msra.mxu0 %v1518
    %v1520 = vand.u32 %v109, 4294901760
    %1521 = vmatpush.msra.mxu0 %v1520
    %v1522 = vand.u32 %v108, 4294901760
    %1523 = vmatpush.msra.mxu0 %v1522
    %v1524 = vand.u32 %v107, 4294901760
    %1525 = vmatpush.msra.mxu0 %v1524
    %v1526 = vand.u32 %v106, 4294901760
    %1527 = vmatpush.msra.mxu0 %v1526
    %v1528 = vand.u32 %v105, 4294901760
    %1529 = vmatpush.msra.mxu0 %v1528
    %v1530 = vand.u32 %v104, 4294901760
    %1531 = vmatpush.msra.mxu0 %v1530
    %v1532 = vand.u32 %v103, 4294901760
    %1533 = vmatpush.msra.mxu0 %v1532
    %v1534 = vand.u32 %v102, 4294901760
    %1535 = vmatpush.msra.mxu0 %v1534
    %v1536 = vand.u32 %v101, 4294901760
    %1537 = vmatpush.msra.mxu0 %v1536
    %v1538 = vand.u32 %v100, 4294901760
    %1539 = vmatpush.msra.mxu0 %v1538
    %v1540 = vand.u32 %v99, 4294901760
    %1541 = vmatpush.msra.mxu0 %v1540
    %v1542 = vand.u32 %v98, 4294901760
    %1543 = vmatpush.msra.mxu0 %v1542
    %v1544 = vand.u32 %v147, 4294901760
    %v1545 = vsub.f32 %v147, %v1544
    %v1546 = vand.u32 %v1545, 4294901760
    %v1547 = vsub.f32 %v1545, %v1546
    %v1548 = vand.u32 %v1547, 4294901760
    %1549 = vmatmul.f32.gmra.mxu0 %v1548
    %v1550 = vpop.f32.mrf.mxu0
    %v1551 = vadd.f32 %v1386, %v1550
    %v1552 = vand.u32 %v149, 4294901760
    %v1553 = vsub.f32 %v149, %v1552
    %v1554 = vand.u32 %v1553, 4294901760
    %v1555 = vsub.f32 %v1553, %v1554
    %v1556 = vand.u32 %v1555, 4294901760
    %1557 = vmatmul.f32.gmra.mxu0 %v1556
    %v1558 = vpop.f32.mrf.mxu0
    %v1559 = vadd.f32 %v1390, %v1558
    %v1560 = vand.u32 %v151, 4294901760
    %v1561 = vsub.f32 %v151, %v1560
    %v1562 = vand.u32 %v1561, 4294901760
    %v1563 = vsub.f32 %v1561, %v1562
    %v1564 = vand.u32 %v1563, 4294901760
    %1565 = vmatmul.f32.gmra.mxu0 %v1564
    %v1566 = vpop.f32.mrf.mxu0
    %v1567 = vadd.f32 %v1394, %v1566
    %v1568 = vand.u32 %v153, 4294901760
    %v1569 = vsub.f32 %v153, %v1568
    %v1570 = vand.u32 %v1569, 4294901760
    %v1571 = vsub.f32 %v1569, %v1570
    %v1572 = vand.u32 %v1571, 4294901760
    %1573 = vmatmul.f32.gmra.mxu0 %v1572
    %v1574 = vpop.f32.mrf.mxu0
    %v1575 = vadd.f32 %v1398, %v1574
    %v1576 = vand.u32 %v155, 4294901760
    %v1577 = vsub.f32 %v155, %v1576
    %v1578 = vand.u32 %v1577, 4294901760
    %v1579 = vsub.f32 %v1577, %v1578
    %v1580 = vand.u32 %v1579, 4294901760
    %1581 = vmatmul.f32.gmra.mxu0 %v1580
    %v1582 = vpop.f32.mrf.mxu0
    %v1583 = vadd.f32 %v1402, %v1582
    %v1584 = vand.u32 %v157, 4294901760
    %v1585 = vsub.f32 %v157, %v1584
    %v1586 = vand.u32 %v1585, 4294901760
    %v1587 = vsub.f32 %v1585, %v1586
    %v1588 = vand.u32 %v1587, 4294901760
    %1589 = vmatmul.f32.gmra.mxu0 %v1588
    %v1590 = vpop.f32.mrf.mxu0
    %v1591 = vadd.f32 %v1406, %v1590
    %v1592 = vand.u32 %v159, 4294901760
    %v1593 = vsub.f32 %v159, %v1592
    %v1594 = vand.u32 %v1593, 4294901760
    %v1595 = vsub.f32 %v1593, %v1594
    %v1596 = vand.u32 %v1595, 4294901760
    %1597 = vmatmul.f32.gmra.mxu0 %v1596
    %v1598 = vpop.f32.mrf.mxu0
    %v1599 = vadd.f32 %v1410, %v1598
    %v1600 = vand.u32 %v161, 4294901760
    %v1601 = vsub.f32 %v161, %v1600
    %v1602 = vand.u32 %v1601, 4294901760
    %v1603 = vsub.f32 %v1601, %v1602
    %v1604 = vand.u32 %v1603, 4294901760
    %1605 = vmatmul.f32.gmra.mxu0 %v1604
    %v1606 = vpop.f32.mrf.mxu0
    %v1607 = vadd.f32 %v1414, %v1606
    %v1608 = vand.u32 %v163, 4294901760
    %v1609 = vsub.f32 %v163, %v1608
    %v1610 = vand.u32 %v1609, 4294901760
    %v1611 = vsub.f32 %v1609, %v1610
    %v1612 = vand.u32 %v1611, 4294901760
    %1613 = vmatmul.f32.gmra.mxu0 %v1612
    %v1614 = vpop.f32.mrf.mxu0
    %v1615 = vadd.f32 %v1418, %v1614
    %v1616 = vand.u32 %v165, 4294901760
    %v1617 = vsub.f32 %v165, %v1616
    %v1618 = vand.u32 %v1617, 4294901760
    %v1619 = vsub.f32 %v1617, %v1618
    %v1620 = vand.u32 %v1619, 4294901760
    %1621 = vmatmul.f32.gmra.mxu0 %v1620
    %v1622 = vpop.f32.mrf.mxu0
    %v1623 = vadd.f32 %v1422, %v1622
    %v1624 = vand.u32 %v167, 4294901760
    %v1625 = vsub.f32 %v167, %v1624
    %v1626 = vand.u32 %v1625, 4294901760
    %v1627 = vsub.f32 %v1625, %v1626
    %v1628 = vand.u32 %v1627, 4294901760
    %1629 = vmatmul.f32.gmra.mxu0 %v1628
    %v1630 = vpop.f32.mrf.mxu0
    %v1631 = vadd.f32 %v1426, %v1630
    %v1632 = vand.u32 %v169, 4294901760
    %v1633 = vsub.f32 %v169, %v1632
    %v1634 = vand.u32 %v1633, 4294901760
    %v1635 = vsub.f32 %v1633, %v1634
    %v1636 = vand.u32 %v1635, 4294901760
    %1637 = vmatmul.f32.gmra.mxu0 %v1636
    %v1638 = vpop.f32.mrf.mxu0
    %v1639 = vadd.f32 %v1430, %v1638
    %v1640 = vand.u32 %v171, 4294901760
    %v1641 = vsub.f32 %v171, %v1640
    %v1642 = vand.u32 %v1641, 4294901760
    %v1643 = vsub.f32 %v1641, %v1642
    %v1644 = vand.u32 %v1643, 4294901760
    %1645 = vmatmul.f32.gmra.mxu0 %v1644
    %v1646 = vpop.f32.mrf.mxu0
    %v1647 = vadd.f32 %v1434, %v1646
    %v1648 = vand.u32 %v173, 4294901760
    %v1649 = vsub.f32 %v173, %v1648
    %v1650 = vand.u32 %v1649, 4294901760
    %v1651 = vsub.f32 %v1649, %v1650
    %v1652 = vand.u32 %v1651, 4294901760
    %1653 = vmatmul.f32.gmra.mxu0 %v1652
    %v1654 = vpop.f32.mrf.mxu0
    %v1655 = vadd.f32 %v1438, %v1654
    %v1656 = vand.u32 %v175, 4294901760
    %v1657 = vsub.f32 %v175, %v1656
    %v1658 = vand.u32 %v1657, 4294901760
    %v1659 = vsub.f32 %v1657, %v1658
    %v1660 = vand.u32 %v1659, 4294901760
    %1661 = vmatmul.f32.gmra.mxu0 %v1660
    %v1662 = vpop.f32.mrf.mxu0
    %v1663 = vadd.f32 %v1442, %v1662
    %v1664 = vand.u32 %v177, 4294901760
    %v1665 = vsub.f32 %v177, %v1664
    %v1666 = vand.u32 %v1665, 4294901760
    %v1667 = vsub.f32 %v1665, %v1666
    %v1668 = vand.u32 %v1667, 4294901760
    %1669 = vmatmul.f32.gmra.mxu0 %v1668
    %v1670 = vpop.f32.mrf.mxu0
    %v1671 = vadd.f32 %v1446, %v1670
    %v1672 = vand.u32 %v179, 4294901760
    %v1673 = vsub.f32 %v179, %v1672
    %v1674 = vand.u32 %v1673, 4294901760
    %v1675 = vsub.f32 %v1673, %v1674
    %v1676 = vand.u32 %v1675, 4294901760
    %1677 = vmatmul.f32.gmra.mxu0 %v1676
    %v1678 = vpop.f32.mrf.mxu0
    %v1679 = vadd.f32 %v1450, %v1678
    %v1680 = vand.u32 %v181, 4294901760
    %v1681 = vsub.f32 %v181, %v1680
    %v1682 = vand.u32 %v1681, 4294901760
    %v1683 = vsub.f32 %v1681, %v1682
    %v1684 = vand.u32 %v1683, 4294901760
    %1685 = vmatmul.f32.gmra.mxu0 %v1684
    %v1686 = vpop.f32.mrf.mxu0
    %v1687 = vadd.f32 %v1454, %v1686
    %v1688 = vand.u32 %v183, 4294901760
    %v1689 = vsub.f32 %v183, %v1688
    %v1690 = vand.u32 %v1689, 4294901760
    %v1691 = vsub.f32 %v1689, %v1690
    %v1692 = vand.u32 %v1691, 4294901760
    %1693 = vmatmul.f32.gmra.mxu0 %v1692
    %v1694 = vpop.f32.mrf.mxu0
    %v1695 = vadd.f32 %v1458, %v1694
    %v1696 = vand.u32 %v185, 4294901760
    %v1697 = vsub.f32 %v185, %v1696
    %v1698 = vand.u32 %v1697, 4294901760
    %v1699 = vsub.f32 %v1697, %v1698
    %v1700 = vand.u32 %v1699, 4294901760
    %1701 = vmatmul.f32.gmra.mxu0 %v1700
    %v1702 = vpop.f32.mrf.mxu0
    %v1703 = vadd.f32 %v1462, %v1702
    %v1704 = vand.u32 %v187, 4294901760
    %v1705 = vsub.f32 %v187, %v1704
    %v1706 = vand.u32 %v1705, 4294901760
    %v1707 = vsub.f32 %v1705, %v1706
    %v1708 = vand.u32 %v1707, 4294901760
    %1709 = vmatmul.f32.gmra.mxu0 %v1708
    %v1710 = vpop.f32.mrf.mxu0
    %v1711 = vadd.f32 %v1466, %v1710
    %v1712 = vand.u32 %v189, 4294901760
    %v1713 = vsub.f32 %v189, %v1712
    %v1714 = vand.u32 %v1713, 4294901760
    %v1715 = vsub.f32 %v1713, %v1714
    %v1716 = vand.u32 %v1715, 4294901760
    %1717 = vmatmul.f32.gmra.mxu0 %v1716
    %v1718 = vpop.f32.mrf.mxu0
    %v1719 = vadd.f32 %v1470, %v1718
    %v1720 = vand.u32 %v191, 4294901760
    %v1721 = vsub.f32 %v191, %v1720
    %v1722 = vand.u32 %v1721, 4294901760
    %v1723 = vsub.f32 %v1721, %v1722
    %v1724 = vand.u32 %v1723, 4294901760
    %1725 = vmatmul.f32.gmra.mxu0 %v1724
    %v1726 = vpop.f32.mrf.mxu0
    %v1727 = vadd.f32 %v1474, %v1726
    %v1728 = vand.u32 %v193, 4294901760
    %v1729 = vsub.f32 %v193, %v1728
    %v1730 = vand.u32 %v1729, 4294901760
    %v1731 = vsub.f32 %v1729, %v1730
    %v1732 = vand.u32 %v1731, 4294901760
    %1733 = vmatmul.f32.gmra.mxu0 %v1732
    %v1734 = vpop.f32.mrf.mxu0
    %v1735 = vadd.f32 %v1478, %v1734
    %v1736 = vand.u32 %v195, 4294901760
    %v1737 = vsub.f32 %v195, %v1736
    %v1738 = vand.u32 %v1737, 4294901760
    %v1739 = vsub.f32 %v1737, %v1738
    %v1740 = vand.u32 %v1739, 4294901760
    %1741 = vmatmul.f32.gmra.mxu0 %v1740
    %v1742 = vpop.f32.mrf.mxu0
    %v1743 = vadd.f32 %v1482, %v1742
    %v1744 = vand.u32 %v197, 4294901760
    %v1745 = vsub.f32 %v197, %v1744
    %v1746 = vand.u32 %v1745, 4294901760
    %v1747 = vsub.f32 %v1745, %v1746
    %v1748 = vand.u32 %v1747, 4294901760
    %1749 = vmatmul.f32.gmra.mxu0 %v1748
    %v1750 = vpop.f32.mrf.mxu0
    %v1751 = vadd.f32 %v1486, %v1750
    %v1752 = vand.u32 %v199, 4294901760
    %v1753 = vsub.f32 %v199, %v1752
    %v1754 = vand.u32 %v1753, 4294901760
    %v1755 = vsub.f32 %v1753, %v1754
    %v1756 = vand.u32 %v1755, 4294901760
    %1757 = vmatmul.f32.gmra.mxu0 %v1756
    %v1758 = vpop.f32.mrf.mxu0
    %v1759 = vadd.f32 %v1490, %v1758
    %v1760 = vand.u32 %v201, 4294901760
    %v1761 = vsub.f32 %v201, %v1760
    %v1762 = vand.u32 %v1761, 4294901760
    %v1763 = vsub.f32 %v1761, %v1762
    %v1764 = vand.u32 %v1763, 4294901760
    %1765 = vmatmul.f32.gmra.mxu0 %v1764
    %v1766 = vpop.f32.mrf.mxu0
    %v1767 = vadd.f32 %v1494, %v1766
    %v1768 = vand.u32 %v203, 4294901760
    %v1769 = vsub.f32 %v203, %v1768
    %v1770 = vand.u32 %v1769, 4294901760
    %v1771 = vsub.f32 %v1769, %v1770
    %v1772 = vand.u32 %v1771, 4294901760
    %1773 = vmatmul.f32.gmra.mxu0 %v1772
    %v1774 = vpop.f32.mrf.mxu0
    %v1775 = vadd.f32 %v1498, %v1774
    %v1776 = vand.u32 %v205, 4294901760
    %v1777 = vsub.f32 %v205, %v1776
    %v1778 = vand.u32 %v1777, 4294901760
    %v1779 = vsub.f32 %v1777, %v1778
    %v1780 = vand.u32 %v1779, 4294901760
    %1781 = vmatmul.f32.gmra.mxu0 %v1780
    %v1782 = vpop.f32.mrf.mxu0
    %v1783 = vadd.f32 %v1502, %v1782
    %v1784 = vand.u32 %v207, 4294901760
    %v1785 = vsub.f32 %v207, %v1784
    %v1786 = vand.u32 %v1785, 4294901760
    %v1787 = vsub.f32 %v1785, %v1786
    %v1788 = vand.u32 %v1787, 4294901760
    %1789 = vmatmul.f32.gmra.mxu0 %v1788
    %v1790 = vpop.f32.mrf.mxu0
    %v1791 = vadd.f32 %v1506, %v1790
    %v1792 = vand.u32 %v209, 4294901760
    %v1793 = vsub.f32 %v209, %v1792
    %v1794 = vand.u32 %v1793, 4294901760
    %v1795 = vsub.f32 %v1793, %v1794
    %v1796 = vand.u32 %v1795, 4294901760
    %1797 = vmatmul.f32.gmra.mxu0 %v1796
    %v1798 = vpop.f32.mrf.mxu0
    %v1799 = vadd.f32 %v1510, %v1798
    %1800 = vdwg.mxu0
    %v1801 = vand.u32 %v113, 4294901760
    %v1802 = vsub.f32 %v113, %v1801
    %v1803 = vand.u32 %v1802, 4294901760
    %v1804 = vsub.f32 %v1802, %v1803
    %v1805 = vand.u32 %v1804, 4294901760
    %1806 = vmatpush.msra.mxu0 %v1805
    %v1807 = vand.u32 %v112, 4294901760
    %v1808 = vsub.f32 %v112, %v1807
    %v1809 = vand.u32 %v1808, 4294901760
    %v1810 = vsub.f32 %v1808, %v1809
    %v1811 = vand.u32 %v1810, 4294901760
    %1812 = vmatpush.msra.mxu0 %v1811
    %v1813 = vand.u32 %v111, 4294901760
    %v1814 = vsub.f32 %v111, %v1813
    %v1815 = vand.u32 %v1814, 4294901760
    %v1816 = vsub.f32 %v1814, %v1815
    %v1817 = vand.u32 %v1816, 4294901760
    %1818 = vmatpush.msra.mxu0 %v1817
    %v1819 = vand.u32 %v110, 4294901760
    %v1820 = vsub.f32 %v110, %v1819
    %v1821 = vand.u32 %v1820, 4294901760
    %v1822 = vsub.f32 %v1820, %v1821
    %v1823 = vand.u32 %v1822, 4294901760
    %1824 = vmatpush.msra.mxu0 %v1823
    %v1825 = vand.u32 %v109, 4294901760
    %v1826 = vsub.f32 %v109, %v1825
    %v1827 = vand.u32 %v1826, 4294901760
    %v1828 = vsub.f32 %v1826, %v1827
    %v1829 = vand.u32 %v1828, 4294901760
    %1830 = vmatpush.msra.mxu0 %v1829
    %v1831 = vand.u32 %v108, 4294901760
    %v1832 = vsub.f32 %v108, %v1831
    %v1833 = vand.u32 %v1832, 4294901760
    %v1834 = vsub.f32 %v1832, %v1833
    %v1835 = vand.u32 %v1834, 4294901760
    %1836 = vmatpush.msra.mxu0 %v1835
    %v1837 = vand.u32 %v107, 4294901760
    %v1838 = vsub.f32 %v107, %v1837
    %v1839 = vand.u32 %v1838, 4294901760
    %v1840 = vsub.f32 %v1838, %v1839
    %v1841 = vand.u32 %v1840, 4294901760
    %1842 = vmatpush.msra.mxu0 %v1841
    %v1843 = vand.u32 %v106, 4294901760
    %v1844 = vsub.f32 %v106, %v1843
    %v1845 = vand.u32 %v1844, 4294901760
    %v1846 = vsub.f32 %v1844, %v1845
    %v1847 = vand.u32 %v1846, 4294901760
    %1848 = vmatpush.msra.mxu0 %v1847
    %v1849 = vand.u32 %v105, 4294901760
    %v1850 = vsub.f32 %v105, %v1849
    %v1851 = vand.u32 %v1850, 4294901760
    %v1852 = vsub.f32 %v1850, %v1851
    %v1853 = vand.u32 %v1852, 4294901760
    %1854 = vmatpush.msra.mxu0 %v1853
    %v1855 = vand.u32 %v104, 4294901760
    %v1856 = vsub.f32 %v104, %v1855
    %v1857 = vand.u32 %v1856, 4294901760
    %v1858 = vsub.f32 %v1856, %v1857
    %v1859 = vand.u32 %v1858, 4294901760
    %1860 = vmatpush.msra.mxu0 %v1859
    %v1861 = vand.u32 %v103, 4294901760
    %v1862 = vsub.f32 %v103, %v1861
    %v1863 = vand.u32 %v1862, 4294901760
    %v1864 = vsub.f32 %v1862, %v1863
    %v1865 = vand.u32 %v1864, 4294901760
    %1866 = vmatpush.msra.mxu0 %v1865
    %v1867 = vand.u32 %v102, 4294901760
    %v1868 = vsub.f32 %v102, %v1867
    %v1869 = vand.u32 %v1868, 4294901760
    %v1870 = vsub.f32 %v1868, %v1869
    %v1871 = vand.u32 %v1870, 4294901760
    %1872 = vmatpush.msra.mxu0 %v1871
    %v1873 = vand.u32 %v101, 4294901760
    %v1874 = vsub.f32 %v101, %v1873
    %v1875 = vand.u32 %v1874, 4294901760
    %v1876 = vsub.f32 %v1874, %v1875
    %v1877 = vand.u32 %v1876, 4294901760
    %1878 = vmatpush.msra.mxu0 %v1877
    %v1879 = vand.u32 %v100, 4294901760
    %v1880 = vsub.f32 %v100, %v1879
    %v1881 = vand.u32 %v1880, 4294901760
    %v1882 = vsub.f32 %v1880, %v1881
    %v1883 = vand.u32 %v1882, 4294901760
    %1884 = vmatpush.msra.mxu0 %v1883
    %v1885 = vand.u32 %v99, 4294901760
    %v1886 = vsub.f32 %v99, %v1885
    %v1887 = vand.u32 %v1886, 4294901760
    %v1888 = vsub.f32 %v1886, %v1887
    %v1889 = vand.u32 %v1888, 4294901760
    %1890 = vmatpush.msra.mxu0 %v1889
    %v1891 = vand.u32 %v98, 4294901760
    %v1892 = vsub.f32 %v98, %v1891
    %v1893 = vand.u32 %v1892, 4294901760
    %v1894 = vsub.f32 %v1892, %v1893
    %v1895 = vand.u32 %v1894, 4294901760
    %1896 = vmatpush.msra.mxu0 %v1895
    %v1897 = vand.u32 %v147, 4294901760
    %1898 = vmatmul.f32.gmra.mxu0 %v1897
    %v1899 = vpop.f32.mrf.mxu0
    %v1900 = vadd.f32 %v1551, %v1899
    %v1901 = vand.u32 %v149, 4294901760
    %1902 = vmatmul.f32.gmra.mxu0 %v1901
    %v1903 = vpop.f32.mrf.mxu0
    %v1904 = vadd.f32 %v1559, %v1903
    %v1905 = vand.u32 %v151, 4294901760
    %1906 = vmatmul.f32.gmra.mxu0 %v1905
    %v1907 = vpop.f32.mrf.mxu0
    %v1908 = vadd.f32 %v1567, %v1907
    %v1909 = vand.u32 %v153, 4294901760
    %1910 = vmatmul.f32.gmra.mxu0 %v1909
    %v1911 = vpop.f32.mrf.mxu0
    %v1912 = vadd.f32 %v1575, %v1911
    %v1913 = vand.u32 %v155, 4294901760
    %1914 = vmatmul.f32.gmra.mxu0 %v1913
    %v1915 = vpop.f32.mrf.mxu0
    %v1916 = vadd.f32 %v1583, %v1915
    %v1917 = vand.u32 %v157, 4294901760
    %1918 = vmatmul.f32.gmra.mxu0 %v1917
    %v1919 = vpop.f32.mrf.mxu0
    %v1920 = vadd.f32 %v1591, %v1919
    %v1921 = vand.u32 %v159, 4294901760
    %1922 = vmatmul.f32.gmra.mxu0 %v1921
    %v1923 = vpop.f32.mrf.mxu0
    %v1924 = vadd.f32 %v1599, %v1923
    %v1925 = vand.u32 %v161, 4294901760
    %1926 = vmatmul.f32.gmra.mxu0 %v1925
    %v1927 = vpop.f32.mrf.mxu0
    %v1928 = vadd.f32 %v1607, %v1927
    %v1929 = vand.u32 %v163, 4294901760
    %1930 = vmatmul.f32.gmra.mxu0 %v1929
    %v1931 = vpop.f32.mrf.mxu0
    %v1932 = vadd.f32 %v1615, %v1931
    %v1933 = vand.u32 %v165, 4294901760
    %1934 = vmatmul.f32.gmra.mxu0 %v1933
    %v1935 = vpop.f32.mrf.mxu0
    %v1936 = vadd.f32 %v1623, %v1935
    %v1937 = vand.u32 %v167, 4294901760
    %1938 = vmatmul.f32.gmra.mxu0 %v1937
    %v1939 = vpop.f32.mrf.mxu0
    %v1940 = vadd.f32 %v1631, %v1939
    %v1941 = vand.u32 %v169, 4294901760
    %1942 = vmatmul.f32.gmra.mxu0 %v1941
    %v1943 = vpop.f32.mrf.mxu0
    %v1944 = vadd.f32 %v1639, %v1943
    %v1945 = vand.u32 %v171, 4294901760
    %1946 = vmatmul.f32.gmra.mxu0 %v1945
    %v1947 = vpop.f32.mrf.mxu0
    %v1948 = vadd.f32 %v1647, %v1947
    %v1949 = vand.u32 %v173, 4294901760
    %1950 = vmatmul.f32.gmra.mxu0 %v1949
    %v1951 = vpop.f32.mrf.mxu0
    %v1952 = vadd.f32 %v1655, %v1951
    %v1953 = vand.u32 %v175, 4294901760
    %1954 = vmatmul.f32.gmra.mxu0 %v1953
    %v1955 = vpop.f32.mrf.mxu0
    %v1956 = vadd.f32 %v1663, %v1955
    %v1957 = vand.u32 %v177, 4294901760
    %1958 = vmatmul.f32.gmra.mxu0 %v1957
    %v1959 = vpop.f32.mrf.mxu0
    %v1960 = vadd.f32 %v1671, %v1959
    %v1961 = vand.u32 %v179, 4294901760
    %1962 = vmatmul.f32.gmra.mxu0 %v1961
    %v1963 = vpop.f32.mrf.mxu0
    %v1964 = vadd.f32 %v1679, %v1963
    %v1965 = vand.u32 %v181, 4294901760
    %1966 = vmatmul.f32.gmra.mxu0 %v1965
    %v1967 = vpop.f32.mrf.mxu0
    %v1968 = vadd.f32 %v1687, %v1967
    %v1969 = vand.u32 %v183, 4294901760
    %1970 = vmatmul.f32.gmra.mxu0 %v1969
    %v1971 = vpop.f32.mrf.mxu0
    %v1972 = vadd.f32 %v1695, %v1971
    %v1973 = vand.u32 %v185, 4294901760
    %1974 = vmatmul.f32.gmra.mxu0 %v1973
    %v1975 = vpop.f32.mrf.mxu0
    %v1976 = vadd.f32 %v1703, %v1975
    %v1977 = vand.u32 %v187, 4294901760
    %1978 = vmatmul.f32.gmra.mxu0 %v1977
    %v1979 = vpop.f32.mrf.mxu0
    %v1980 = vadd.f32 %v1711, %v1979
    %v1981 = vand.u32 %v189, 4294901760
    %1982 = vmatmul.f32.gmra.mxu0 %v1981
    %v1983 = vpop.f32.mrf.mxu0
    %v1984 = vadd.f32 %v1719, %v1983
    %v1985 = vand.u32 %v191, 4294901760
    %1986 = vmatmul.f32.gmra.mxu0 %v1985
    %v1987 = vpop.f32.mrf.mxu0
    %v1988 = vadd.f32 %v1727, %v1987
    %v1989 = vand.u32 %v193, 4294901760
    %1990 = vmatmul.f32.gmra.mxu0 %v1989
    %v1991 = vpop.f32.mrf.mxu0
    %v1992 = vadd.f32 %v1735, %v1991
    %v1993 = vand.u32 %v195, 4294901760
    %1994 = vmatmul.f32.gmra.mxu0 %v1993
    %v1995 = vpop.f32.mrf.mxu0
    %v1996 = vadd.f32 %v1743, %v1995
    %v1997 = vand.u32 %v197, 4294901760
    %1998 = vmatmul.f32.gmra.mxu0 %v1997
    %v1999 = vpop.f32.mrf.mxu0
    %v2000 = vadd.f32 %v1751, %v1999
    %v2001 = vand.u32 %v199, 4294901760
    %2002 = vmatmul.f32.gmra.mxu0 %v2001
    %v2003 = vpop.f32.mrf.mxu0
    %v2004 = vadd.f32 %v1759, %v2003
    %v2005 = vand.u32 %v201, 4294901760
    %2006 = vmatmul.f32.gmra.mxu0 %v2005
    %v2007 = vpop.f32.mrf.mxu0
    %v2008 = vadd.f32 %v1767, %v2007
    %v2009 = vand.u32 %v203, 4294901760
    %2010 = vmatmul.f32.gmra.mxu0 %v2009
    %v2011 = vpop.f32.mrf.mxu0
    %v2012 = vadd.f32 %v1775, %v2011
    %v2013 = vand.u32 %v205, 4294901760
    %2014 = vmatmul.f32.gmra.mxu0 %v2013
    %v2015 = vpop.f32.mrf.mxu0
    %v2016 = vadd.f32 %v1783, %v2015
    %v2017 = vand.u32 %v207, 4294901760
    %2018 = vmatmul.f32.gmra.mxu0 %v2017
    %v2019 = vpop.f32.mrf.mxu0
    %v2020 = vadd.f32 %v1791, %v2019
    %v2021 = vand.u32 %v209, 4294901760
    %2022 = vmatmul.f32.gmra.mxu0 %v2021
    %v2023 = vpop.f32.mrf.mxu0
    %v2024 = vadd.f32 %v1799, %v2023
    %2025 = vdwg.mxu0
    %v2026 = vand.u32 %v113, 4294901760
    %v2027 = vsub.f32 %v113, %v2026
    %2028 = vmatpush.msra.mxu0 %v2027
    %v2029 = vand.u32 %v112, 4294901760
    %v2030 = vsub.f32 %v112, %v2029
    %2031 = vmatpush.msra.mxu0 %v2030
    %v2032 = vand.u32 %v111, 4294901760
    %v2033 = vsub.f32 %v111, %v2032
    %2034 = vmatpush.msra.mxu0 %v2033
    %v2035 = vand.u32 %v110, 4294901760
    %v2036 = vsub.f32 %v110, %v2035
    %2037 = vmatpush.msra.mxu0 %v2036
    %v2038 = vand.u32 %v109, 4294901760
    %v2039 = vsub.f32 %v109, %v2038
    %2040 = vmatpush.msra.mxu0 %v2039
    %v2041 = vand.u32 %v108, 4294901760
    %v2042 = vsub.f32 %v108, %v2041
    %2043 = vmatpush.msra.mxu0 %v2042
    %v2044 = vand.u32 %v107, 4294901760
    %v2045 = vsub.f32 %v107, %v2044
    %2046 = vmatpush.msra.mxu0 %v2045
    %v2047 = vand.u32 %v106, 4294901760
    %v2048 = vsub.f32 %v106, %v2047
    %2049 = vmatpush.msra.mxu0 %v2048
    %v2050 = vand.u32 %v105, 4294901760
    %v2051 = vsub.f32 %v105, %v2050
    %2052 = vmatpush.msra.mxu0 %v2051
    %v2053 = vand.u32 %v104, 4294901760
    %v2054 = vsub.f32 %v104, %v2053
    %2055 = vmatpush.msra.mxu0 %v2054
    %v2056 = vand.u32 %v103, 4294901760
    %v2057 = vsub.f32 %v103, %v2056
    %2058 = vmatpush.msra.mxu0 %v2057
    %v2059 = vand.u32 %v102, 4294901760
    %v2060 = vsub.f32 %v102, %v2059
    %2061 = vmatpush.msra.mxu0 %v2060
    %v2062 = vand.u32 %v101, 4294901760
    %v2063 = vsub.f32 %v101, %v2062
    %2064 = vmatpush.msra.mxu0 %v2063
    %v2065 = vand.u32 %v100, 4294901760
    %v2066 = vsub.f32 %v100, %v2065
    %2067 = vmatpush.msra.mxu0 %v2066
    %v2068 = vand.u32 %v99, 4294901760
    %v2069 = vsub.f32 %v99, %v2068
    %2070 = vmatpush.msra.mxu0 %v2069
    %v2071 = vand.u32 %v98, 4294901760
    %v2072 = vsub.f32 %v98, %v2071
    %2073 = vmatpush.msra.mxu0 %v2072
    %v2074 = vand.u32 %v147, 4294901760
    %v2075 = vsub.f32 %v147, %v2074
    %2076 = vmatmul.f32.gmra.mxu0 %v2075
    %v2077 = vpop.f32.mrf.mxu0
    %v2078 = vadd.f32 %v1900, %v2077
    %v2079 = vand.u32 %v149, 4294901760
    %v2080 = vsub.f32 %v149, %v2079
    %2081 = vmatmul.f32.gmra.mxu0 %v2080
    %v2082 = vpop.f32.mrf.mxu0
    %v2083 = vadd.f32 %v1904, %v2082
    %v2084 = vand.u32 %v151, 4294901760
    %v2085 = vsub.f32 %v151, %v2084
    %2086 = vmatmul.f32.gmra.mxu0 %v2085
    %v2087 = vpop.f32.mrf.mxu0
    %v2088 = vadd.f32 %v1908, %v2087
    %v2089 = vand.u32 %v153, 4294901760
    %v2090 = vsub.f32 %v153, %v2089
    %2091 = vmatmul.f32.gmra.mxu0 %v2090
    %v2092 = vpop.f32.mrf.mxu0
    %v2093 = vadd.f32 %v1912, %v2092
    %v2094 = vand.u32 %v155, 4294901760
    %v2095 = vsub.f32 %v155, %v2094
    %2096 = vmatmul.f32.gmra.mxu0 %v2095
    %v2097 = vpop.f32.mrf.mxu0
    %v2098 = vadd.f32 %v1916, %v2097
    %v2099 = vand.u32 %v157, 4294901760
    %v2100 = vsub.f32 %v157, %v2099
    %2101 = vmatmul.f32.gmra.mxu0 %v2100
    %v2102 = vpop.f32.mrf.mxu0
    %v2103 = vadd.f32 %v1920, %v2102
    %v2104 = vand.u32 %v159, 4294901760
    %v2105 = vsub.f32 %v159, %v2104
    %2106 = vmatmul.f32.gmra.mxu0 %v2105
    %v2107 = vpop.f32.mrf.mxu0
    %v2108 = vadd.f32 %v1924, %v2107
    %v2109 = vand.u32 %v161, 4294901760
    %v2110 = vsub.f32 %v161, %v2109
    %2111 = vmatmul.f32.gmra.mxu0 %v2110
    %v2112 = vpop.f32.mrf.mxu0
    %v2113 = vadd.f32 %v1928, %v2112
    %v2114 = vand.u32 %v163, 4294901760
    %v2115 = vsub.f32 %v163, %v2114
    %2116 = vmatmul.f32.gmra.mxu0 %v2115
    %v2117 = vpop.f32.mrf.mxu0
    %v2118 = vadd.f32 %v1932, %v2117
    %v2119 = vand.u32 %v165, 4294901760
    %v2120 = vsub.f32 %v165, %v2119
    %2121 = vmatmul.f32.gmra.mxu0 %v2120
    %v2122 = vpop.f32.mrf.mxu0
    %v2123 = vadd.f32 %v1936, %v2122
    %v2124 = vand.u32 %v167, 4294901760
    %v2125 = vsub.f32 %v167, %v2124
    %2126 = vmatmul.f32.gmra.mxu0 %v2125
    %v2127 = vpop.f32.mrf.mxu0
    %v2128 = vadd.f32 %v1940, %v2127
    %v2129 = vand.u32 %v169, 4294901760
    %v2130 = vsub.f32 %v169, %v2129
    %2131 = vmatmul.f32.gmra.mxu0 %v2130
    %v2132 = vpop.f32.mrf.mxu0
    %v2133 = vadd.f32 %v1944, %v2132
    %v2134 = vand.u32 %v171, 4294901760
    %v2135 = vsub.f32 %v171, %v2134
    %2136 = vmatmul.f32.gmra.mxu0 %v2135
    %v2137 = vpop.f32.mrf.mxu0
    %v2138 = vadd.f32 %v1948, %v2137
    %v2139 = vand.u32 %v173, 4294901760
    %v2140 = vsub.f32 %v173, %v2139
    %2141 = vmatmul.f32.gmra.mxu0 %v2140
    %v2142 = vpop.f32.mrf.mxu0
    %v2143 = vadd.f32 %v1952, %v2142
    %v2144 = vand.u32 %v175, 4294901760
    %v2145 = vsub.f32 %v175, %v2144
    %2146 = vmatmul.f32.gmra.mxu0 %v2145
    %v2147 = vpop.f32.mrf.mxu0
    %v2148 = vadd.f32 %v1956, %v2147
    %v2149 = vand.u32 %v177, 4294901760
    %v2150 = vsub.f32 %v177, %v2149
    %2151 = vmatmul.f32.gmra.mxu0 %v2150
    %v2152 = vpop.f32.mrf.mxu0
    %v2153 = vadd.f32 %v1960, %v2152
    %v2154 = vand.u32 %v179, 4294901760
    %v2155 = vsub.f32 %v179, %v2154
    %2156 = vmatmul.f32.gmra.mxu0 %v2155
    %v2157 = vpop.f32.mrf.mxu0
    %v2158 = vadd.f32 %v1964, %v2157
    %v2159 = vand.u32 %v181, 4294901760
    %v2160 = vsub.f32 %v181, %v2159
    %2161 = vmatmul.f32.gmra.mxu0 %v2160
    %v2162 = vpop.f32.mrf.mxu0
    %v2163 = vadd.f32 %v1968, %v2162
    %v2164 = vand.u32 %v183, 4294901760
    %v2165 = vsub.f32 %v183, %v2164
    %2166 = vmatmul.f32.gmra.mxu0 %v2165
    %v2167 = vpop.f32.mrf.mxu0
    %v2168 = vadd.f32 %v1972, %v2167
    %v2169 = vand.u32 %v185, 4294901760
    %v2170 = vsub.f32 %v185, %v2169
    %2171 = vmatmul.f32.gmra.mxu0 %v2170
    %v2172 = vpop.f32.mrf.mxu0
    %v2173 = vadd.f32 %v1976, %v2172
    %v2174 = vand.u32 %v187, 4294901760
    %v2175 = vsub.f32 %v187, %v2174
    %2176 = vmatmul.f32.gmra.mxu0 %v2175
    %v2177 = vpop.f32.mrf.mxu0
    %v2178 = vadd.f32 %v1980, %v2177
    %v2179 = vand.u32 %v189, 4294901760
    %v2180 = vsub.f32 %v189, %v2179
    %2181 = vmatmul.f32.gmra.mxu0 %v2180
    %v2182 = vpop.f32.mrf.mxu0
    %v2183 = vadd.f32 %v1984, %v2182
    %v2184 = vand.u32 %v191, 4294901760
    %v2185 = vsub.f32 %v191, %v2184
    %2186 = vmatmul.f32.gmra.mxu0 %v2185
    %v2187 = vpop.f32.mrf.mxu0
    %v2188 = vadd.f32 %v1988, %v2187
    %v2189 = vand.u32 %v193, 4294901760
    %v2190 = vsub.f32 %v193, %v2189
    %2191 = vmatmul.f32.gmra.mxu0 %v2190
    %v2192 = vpop.f32.mrf.mxu0
    %v2193 = vadd.f32 %v1992, %v2192
    %v2194 = vand.u32 %v195, 4294901760
    %v2195 = vsub.f32 %v195, %v2194
    %2196 = vmatmul.f32.gmra.mxu0 %v2195
    %v2197 = vpop.f32.mrf.mxu0
    %v2198 = vadd.f32 %v1996, %v2197
    %v2199 = vand.u32 %v197, 4294901760
    %v2200 = vsub.f32 %v197, %v2199
    %2201 = vmatmul.f32.gmra.mxu0 %v2200
    %v2202 = vpop.f32.mrf.mxu0
    %v2203 = vadd.f32 %v2000, %v2202
    %v2204 = vand.u32 %v199, 4294901760
    %v2205 = vsub.f32 %v199, %v2204
    %2206 = vmatmul.f32.gmra.mxu0 %v2205
    %v2207 = vpop.f32.mrf.mxu0
    %v2208 = vadd.f32 %v2004, %v2207
    %v2209 = vand.u32 %v201, 4294901760
    %v2210 = vsub.f32 %v201, %v2209
    %2211 = vmatmul.f32.gmra.mxu0 %v2210
    %v2212 = vpop.f32.mrf.mxu0
    %v2213 = vadd.f32 %v2008, %v2212
    %v2214 = vand.u32 %v203, 4294901760
    %v2215 = vsub.f32 %v203, %v2214
    %2216 = vmatmul.f32.gmra.mxu0 %v2215
    %v2217 = vpop.f32.mrf.mxu0
    %v2218 = vadd.f32 %v2012, %v2217
    %v2219 = vand.u32 %v205, 4294901760
    %v2220 = vsub.f32 %v205, %v2219
    %2221 = vmatmul.f32.gmra.mxu0 %v2220
    %v2222 = vpop.f32.mrf.mxu0
    %v2223 = vadd.f32 %v2016, %v2222
    %v2224 = vand.u32 %v207, 4294901760
    %v2225 = vsub.f32 %v207, %v2224
    %2226 = vmatmul.f32.gmra.mxu0 %v2225
    %v2227 = vpop.f32.mrf.mxu0
    %v2228 = vadd.f32 %v2020, %v2227
    %v2229 = vand.u32 %v209, 4294901760
    %v2230 = vsub.f32 %v209, %v2229
    %2231 = vmatmul.f32.gmra.mxu0 %v2230
    %v2232 = vpop.f32.mrf.mxu0
    %v2233 = vadd.f32 %v2024, %v2232
    %2234 = vdwg.mxu0
    %v2235 = vand.u32 %v113, 4294901760
    %2236 = vmatpush.msra.mxu0 %v2235
    %v2237 = vand.u32 %v112, 4294901760
    %2238 = vmatpush.msra.mxu0 %v2237
    %v2239 = vand.u32 %v111, 4294901760
    %2240 = vmatpush.msra.mxu0 %v2239
    %v2241 = vand.u32 %v110, 4294901760
    %2242 = vmatpush.msra.mxu0 %v2241
    %v2243 = vand.u32 %v109, 4294901760
    %2244 = vmatpush.msra.mxu0 %v2243
    %v2245 = vand.u32 %v108, 4294901760
    %2246 = vmatpush.msra.mxu0 %v2245
    %v2247 = vand.u32 %v107, 4294901760
    %2248 = vmatpush.msra.mxu0 %v2247
    %v2249 = vand.u32 %v106, 4294901760
    %2250 = vmatpush.msra.mxu0 %v2249
    %v2251 = vand.u32 %v105, 4294901760
    %2252 = vmatpush.msra.mxu0 %v2251
    %v2253 = vand.u32 %v104, 4294901760
    %2254 = vmatpush.msra.mxu0 %v2253
    %v2255 = vand.u32 %v103, 4294901760
    %2256 = vmatpush.msra.mxu0 %v2255
    %v2257 = vand.u32 %v102, 4294901760
    %2258 = vmatpush.msra.mxu0 %v2257
    %v2259 = vand.u32 %v101, 4294901760
    %2260 = vmatpush.msra.mxu0 %v2259
    %v2261 = vand.u32 %v100, 4294901760
    %2262 = vmatpush.msra.mxu0 %v2261
    %v2263 = vand.u32 %v99, 4294901760
    %2264 = vmatpush.msra.mxu0 %v2263
    %v2265 = vand.u32 %v98, 4294901760
    %2266 = vmatpush.msra.mxu0 %v2265
    %v2267 = vand.u32 %v147, 4294901760
    %v2268 = vsub.f32 %v147, %v2267
    %v2269 = vand.u32 %v2268, 4294901760
    %2270 = vmatmul.f32.gmra.mxu0 %v2269
    %v2271 = vpop.f32.mrf.mxu0
    %v2272 = vadd.f32 %v2078, %v2271
    %v2273 = vand.u32 %v149, 4294901760
    %v2274 = vsub.f32 %v149, %v2273
    %v2275 = vand.u32 %v2274, 4294901760
    %2276 = vmatmul.f32.gmra.mxu0 %v2275
    %v2277 = vpop.f32.mrf.mxu0
    %v2278 = vadd.f32 %v2083, %v2277
    %v2279 = vand.u32 %v151, 4294901760
    %v2280 = vsub.f32 %v151, %v2279
    %v2281 = vand.u32 %v2280, 4294901760
    %2282 = vmatmul.f32.gmra.mxu0 %v2281
    %v2283 = vpop.f32.mrf.mxu0
    %v2284 = vadd.f32 %v2088, %v2283
    %v2285 = vand.u32 %v153, 4294901760
    %v2286 = vsub.f32 %v153, %v2285
    %v2287 = vand.u32 %v2286, 4294901760
    %2288 = vmatmul.f32.gmra.mxu0 %v2287
    %v2289 = vpop.f32.mrf.mxu0
    %v2290 = vadd.f32 %v2093, %v2289
    %v2291 = vand.u32 %v155, 4294901760
    %v2292 = vsub.f32 %v155, %v2291
    %v2293 = vand.u32 %v2292, 4294901760
    %2294 = vmatmul.f32.gmra.mxu0 %v2293
    %v2295 = vpop.f32.mrf.mxu0
    %v2296 = vadd.f32 %v2098, %v2295
    %v2297 = vand.u32 %v157, 4294901760
    %v2298 = vsub.f32 %v157, %v2297
    %v2299 = vand.u32 %v2298, 4294901760
    %2300 = vmatmul.f32.gmra.mxu0 %v2299
    %v2301 = vpop.f32.mrf.mxu0
    %v2302 = vadd.f32 %v2103, %v2301
    %v2303 = vand.u32 %v159, 4294901760
    %v2304 = vsub.f32 %v159, %v2303
    %v2305 = vand.u32 %v2304, 4294901760
    %2306 = vmatmul.f32.gmra.mxu0 %v2305
    %v2307 = vpop.f32.mrf.mxu0
    %v2308 = vadd.f32 %v2108, %v2307
    %v2309 = vand.u32 %v161, 4294901760
    %v2310 = vsub.f32 %v161, %v2309
    %v2311 = vand.u32 %v2310, 4294901760
    %2312 = vmatmul.f32.gmra.mxu0 %v2311
    %v2313 = vpop.f32.mrf.mxu0
    %v2314 = vadd.f32 %v2113, %v2313
    %v2315 = vand.u32 %v163, 4294901760
    %v2316 = vsub.f32 %v163, %v2315
    %v2317 = vand.u32 %v2316, 4294901760
    %2318 = vmatmul.f32.gmra.mxu0 %v2317
    %v2319 = vpop.f32.mrf.mxu0
    %v2320 = vadd.f32 %v2118, %v2319
    %v2321 = vand.u32 %v165, 4294901760
    %v2322 = vsub.f32 %v165, %v2321
    %v2323 = vand.u32 %v2322, 4294901760
    %2324 = vmatmul.f32.gmra.mxu0 %v2323
    %v2325 = vpop.f32.mrf.mxu0
    %v2326 = vadd.f32 %v2123, %v2325
    %v2327 = vand.u32 %v167, 4294901760
    %v2328 = vsub.f32 %v167, %v2327
    %v2329 = vand.u32 %v2328, 4294901760
    %2330 = vmatmul.f32.gmra.mxu0 %v2329
    %v2331 = vpop.f32.mrf.mxu0
    %v2332 = vadd.f32 %v2128, %v2331
    %v2333 = vand.u32 %v169, 4294901760
    %v2334 = vsub.f32 %v169, %v2333
    %v2335 = vand.u32 %v2334, 4294901760
    %2336 = vmatmul.f32.gmra.mxu0 %v2335
    %v2337 = vpop.f32.mrf.mxu0
    %v2338 = vadd.f32 %v2133, %v2337
    %v2339 = vand.u32 %v171, 4294901760
    %v2340 = vsub.f32 %v171, %v2339
    %v2341 = vand.u32 %v2340, 4294901760
    %2342 = vmatmul.f32.gmra.mxu0 %v2341
    %v2343 = vpop.f32.mrf.mxu0
    %v2344 = vadd.f32 %v2138, %v2343
    %v2345 = vand.u32 %v173, 4294901760
    %v2346 = vsub.f32 %v173, %v2345
    %v2347 = vand.u32 %v2346, 4294901760
    %2348 = vmatmul.f32.gmra.mxu0 %v2347
    %v2349 = vpop.f32.mrf.mxu0
    %v2350 = vadd.f32 %v2143, %v2349
    %v2351 = vand.u32 %v175, 4294901760
    %v2352 = vsub.f32 %v175, %v2351
    %v2353 = vand.u32 %v2352, 4294901760
    %2354 = vmatmul.f32.gmra.mxu0 %v2353
    %v2355 = vpop.f32.mrf.mxu0
    %v2356 = vadd.f32 %v2148, %v2355
    %v2357 = vand.u32 %v177, 4294901760
    %v2358 = vsub.f32 %v177, %v2357
    %v2359 = vand.u32 %v2358, 4294901760
    %2360 = vmatmul.f32.gmra.mxu0 %v2359
    %v2361 = vpop.f32.mrf.mxu0
    %v2362 = vadd.f32 %v2153, %v2361
    %v2363 = vand.u32 %v179, 4294901760
    %v2364 = vsub.f32 %v179, %v2363
    %v2365 = vand.u32 %v2364, 4294901760
    %2366 = vmatmul.f32.gmra.mxu0 %v2365
    %v2367 = vpop.f32.mrf.mxu0
    %v2368 = vadd.f32 %v2158, %v2367
    %v2369 = vand.u32 %v181, 4294901760
    %v2370 = vsub.f32 %v181, %v2369
    %v2371 = vand.u32 %v2370, 4294901760
    %2372 = vmatmul.f32.gmra.mxu0 %v2371
    %v2373 = vpop.f32.mrf.mxu0
    %v2374 = vadd.f32 %v2163, %v2373
    %v2375 = vand.u32 %v183, 4294901760
    %v2376 = vsub.f32 %v183, %v2375
    %v2377 = vand.u32 %v2376, 4294901760
    %2378 = vmatmul.f32.gmra.mxu0 %v2377
    %v2379 = vpop.f32.mrf.mxu0
    %v2380 = vadd.f32 %v2168, %v2379
    %v2381 = vand.u32 %v185, 4294901760
    %v2382 = vsub.f32 %v185, %v2381
    %v2383 = vand.u32 %v2382, 4294901760
    %2384 = vmatmul.f32.gmra.mxu0 %v2383
    %v2385 = vpop.f32.mrf.mxu0
    %v2386 = vadd.f32 %v2173, %v2385
    %v2387 = vand.u32 %v187, 4294901760
    %v2388 = vsub.f32 %v187, %v2387
    %v2389 = vand.u32 %v2388, 4294901760
    %2390 = vmatmul.f32.gmra.mxu0 %v2389
    %v2391 = vpop.f32.mrf.mxu0
    %v2392 = vadd.f32 %v2178, %v2391
    %v2393 = vand.u32 %v189, 4294901760
    %v2394 = vsub.f32 %v189, %v2393
    %v2395 = vand.u32 %v2394, 4294901760
    %2396 = vmatmul.f32.gmra.mxu0 %v2395
    %v2397 = vpop.f32.mrf.mxu0
    %v2398 = vadd.f32 %v2183, %v2397
    %v2399 = vand.u32 %v191, 4294901760
    %v2400 = vsub.f32 %v191, %v2399
    %v2401 = vand.u32 %v2400, 4294901760
    %2402 = vmatmul.f32.gmra.mxu0 %v2401
    %v2403 = vpop.f32.mrf.mxu0
    %v2404 = vadd.f32 %v2188, %v2403
    %v2405 = vand.u32 %v193, 4294901760
    %v2406 = vsub.f32 %v193, %v2405
    %v2407 = vand.u32 %v2406, 4294901760
    %2408 = vmatmul.f32.gmra.mxu0 %v2407
    %v2409 = vpop.f32.mrf.mxu0
    %v2410 = vadd.f32 %v2193, %v2409
    %v2411 = vand.u32 %v195, 4294901760
    %v2412 = vsub.f32 %v195, %v2411
    %v2413 = vand.u32 %v2412, 4294901760
    %2414 = vmatmul.f32.gmra.mxu0 %v2413
    %v2415 = vpop.f32.mrf.mxu0
    %v2416 = vadd.f32 %v2198, %v2415
    %v2417 = vand.u32 %v197, 4294901760
    %v2418 = vsub.f32 %v197, %v2417
    %v2419 = vand.u32 %v2418, 4294901760
    %2420 = vmatmul.f32.gmra.mxu0 %v2419
    %v2421 = vpop.f32.mrf.mxu0
    %v2422 = vadd.f32 %v2203, %v2421
    %v2423 = vand.u32 %v199, 4294901760
    %v2424 = vsub.f32 %v199, %v2423
    %v2425 = vand.u32 %v2424, 4294901760
    %2426 = vmatmul.f32.gmra.mxu0 %v2425
    %v2427 = vpop.f32.mrf.mxu0
    %v2428 = vadd.f32 %v2208, %v2427
    %v2429 = vand.u32 %v201, 4294901760
    %v2430 = vsub.f32 %v201, %v2429
    %v2431 = vand.u32 %v2430, 4294901760
    %2432 = vmatmul.f32.gmra.mxu0 %v2431
    %v2433 = vpop.f32.mrf.mxu0
    %v2434 = vadd.f32 %v2213, %v2433
    %v2435 = vand.u32 %v203, 4294901760
    %v2436 = vsub.f32 %v203, %v2435
    %v2437 = vand.u32 %v2436, 4294901760
    %2438 = vmatmul.f32.gmra.mxu0 %v2437
    %v2439 = vpop.f32.mrf.mxu0
    %v2440 = vadd.f32 %v2218, %v2439
    %v2441 = vand.u32 %v205, 4294901760
    %v2442 = vsub.f32 %v205, %v2441
    %v2443 = vand.u32 %v2442, 4294901760
    %2444 = vmatmul.f32.gmra.mxu0 %v2443
    %v2445 = vpop.f32.mrf.mxu0
    %v2446 = vadd.f32 %v2223, %v2445
    %v2447 = vand.u32 %v207, 4294901760
    %v2448 = vsub.f32 %v207, %v2447
    %v2449 = vand.u32 %v2448, 4294901760
    %2450 = vmatmul.f32.gmra.mxu0 %v2449
    %v2451 = vpop.f32.mrf.mxu0
    %v2452 = vadd.f32 %v2228, %v2451
    %v2453 = vand.u32 %v209, 4294901760
    %v2454 = vsub.f32 %v209, %v2453
    %v2455 = vand.u32 %v2454, 4294901760
    %2456 = vmatmul.f32.gmra.mxu0 %v2455
    %v2457 = vpop.f32.mrf.mxu0
    %v2458 = vadd.f32 %v2233, %v2457
    %2459 = vdwg.mxu0
    %v2460 = vand.u32 %v113, 4294901760
    %v2461 = vsub.f32 %v113, %v2460
    %v2462 = vand.u32 %v2461, 4294901760
    %2463 = vmatpush.msra.mxu0 %v2462
    %v2464 = vand.u32 %v112, 4294901760
    %v2465 = vsub.f32 %v112, %v2464
    %v2466 = vand.u32 %v2465, 4294901760
    %2467 = vmatpush.msra.mxu0 %v2466
    %v2468 = vand.u32 %v111, 4294901760
    %v2469 = vsub.f32 %v111, %v2468
    %v2470 = vand.u32 %v2469, 4294901760
    %2471 = vmatpush.msra.mxu0 %v2470
    %v2472 = vand.u32 %v110, 4294901760
    %v2473 = vsub.f32 %v110, %v2472
    %v2474 = vand.u32 %v2473, 4294901760
    %2475 = vmatpush.msra.mxu0 %v2474
    %v2476 = vand.u32 %v109, 4294901760
    %v2477 = vsub.f32 %v109, %v2476
    %v2478 = vand.u32 %v2477, 4294901760
    %2479 = vmatpush.msra.mxu0 %v2478
    %v2480 = vand.u32 %v108, 4294901760
    %v2481 = vsub.f32 %v108, %v2480
    %v2482 = vand.u32 %v2481, 4294901760
    %2483 = vmatpush.msra.mxu0 %v2482
    %v2484 = vand.u32 %v107, 4294901760
    %v2485 = vsub.f32 %v107, %v2484
    %v2486 = vand.u32 %v2485, 4294901760
    %2487 = vmatpush.msra.mxu0 %v2486
    %v2488 = vand.u32 %v106, 4294901760
    %v2489 = vsub.f32 %v106, %v2488
    %v2490 = vand.u32 %v2489, 4294901760
    %2491 = vmatpush.msra.mxu0 %v2490
    %v2492 = vand.u32 %v105, 4294901760
    %v2493 = vsub.f32 %v105, %v2492
    %v2494 = vand.u32 %v2493, 4294901760
    %2495 = vmatpush.msra.mxu0 %v2494
    %v2496 = vand.u32 %v104, 4294901760
    %v2497 = vsub.f32 %v104, %v2496
    %v2498 = vand.u32 %v2497, 4294901760
    %2499 = vmatpush.msra.mxu0 %v2498
    %v2500 = vand.u32 %v103, 4294901760
    %v2501 = vsub.f32 %v103, %v2500
    %v2502 = vand.u32 %v2501, 4294901760
    %2503 = vmatpush.msra.mxu0 %v2502
    %v2504 = vand.u32 %v102, 4294901760
    %v2505 = vsub.f32 %v102, %v2504
    %v2506 = vand.u32 %v2505, 4294901760
    %2507 = vmatpush.msra.mxu0 %v2506
    %v2508 = vand.u32 %v101, 4294901760
    %v2509 = vsub.f32 %v101, %v2508
    %v2510 = vand.u32 %v2509, 4294901760
    %2511 = vmatpush.msra.mxu0 %v2510
    %v2512 = vand.u32 %v100, 4294901760
    %v2513 = vsub.f32 %v100, %v2512
    %v2514 = vand.u32 %v2513, 4294901760
    %2515 = vmatpush.msra.mxu0 %v2514
    %v2516 = vand.u32 %v99, 4294901760
    %v2517 = vsub.f32 %v99, %v2516
    %v2518 = vand.u32 %v2517, 4294901760
    %2519 = vmatpush.msra.mxu0 %v2518
    %v2520 = vand.u32 %v98, 4294901760
    %v2521 = vsub.f32 %v98, %v2520
    %v2522 = vand.u32 %v2521, 4294901760
    %2523 = vmatpush.msra.mxu0 %v2522
    %v2524 = vand.u32 %v147, 4294901760
    %2525 = vmatmul.f32.gmra.mxu0 %v2524
    %v2526 = vpop.f32.mrf.mxu0
    %v2527 = vadd.f32 %v2272, %v2526
    %v2528 = vand.u32 %v149, 4294901760
    %2529 = vmatmul.f32.gmra.mxu0 %v2528
    %v2530 = vpop.f32.mrf.mxu0
    %v2531 = vadd.f32 %v2278, %v2530
    %v2532 = vand.u32 %v151, 4294901760
    %2533 = vmatmul.f32.gmra.mxu0 %v2532
    %v2534 = vpop.f32.mrf.mxu0
    %v2535 = vadd.f32 %v2284, %v2534
    %v2536 = vand.u32 %v153, 4294901760
    %2537 = vmatmul.f32.gmra.mxu0 %v2536
    %v2538 = vpop.f32.mrf.mxu0
    %v2539 = vadd.f32 %v2290, %v2538
    %v2540 = vand.u32 %v155, 4294901760
    %2541 = vmatmul.f32.gmra.mxu0 %v2540
    %v2542 = vpop.f32.mrf.mxu0
    %v2543 = vadd.f32 %v2296, %v2542
    %v2544 = vand.u32 %v157, 4294901760
    %2545 = vmatmul.f32.gmra.mxu0 %v2544
    %v2546 = vpop.f32.mrf.mxu0
    %v2547 = vadd.f32 %v2302, %v2546
    %v2548 = vand.u32 %v159, 4294901760
    %2549 = vmatmul.f32.gmra.mxu0 %v2548
    %v2550 = vpop.f32.mrf.mxu0
    %v2551 = vadd.f32 %v2308, %v2550
    %v2552 = vand.u32 %v161, 4294901760
    %2553 = vmatmul.f32.gmra.mxu0 %v2552
    %v2554 = vpop.f32.mrf.mxu0
    %v2555 = vadd.f32 %v2314, %v2554
    %v2556 = vand.u32 %v163, 4294901760
    %2557 = vmatmul.f32.gmra.mxu0 %v2556
    %v2558 = vpop.f32.mrf.mxu0
    %v2559 = vadd.f32 %v2320, %v2558
    %v2560 = vand.u32 %v165, 4294901760
    %2561 = vmatmul.f32.gmra.mxu0 %v2560
    %v2562 = vpop.f32.mrf.mxu0
    %v2563 = vadd.f32 %v2326, %v2562
    %v2564 = vand.u32 %v167, 4294901760
    %2565 = vmatmul.f32.gmra.mxu0 %v2564
    %v2566 = vpop.f32.mrf.mxu0
    %v2567 = vadd.f32 %v2332, %v2566
    %v2568 = vand.u32 %v169, 4294901760
    %2569 = vmatmul.f32.gmra.mxu0 %v2568
    %v2570 = vpop.f32.mrf.mxu0
    %v2571 = vadd.f32 %v2338, %v2570
    %v2572 = vand.u32 %v171, 4294901760
    %2573 = vmatmul.f32.gmra.mxu0 %v2572
    %v2574 = vpop.f32.mrf.mxu0
    %v2575 = vadd.f32 %v2344, %v2574
    %v2576 = vand.u32 %v173, 4294901760
    %2577 = vmatmul.f32.gmra.mxu0 %v2576
    %v2578 = vpop.f32.mrf.mxu0
    %v2579 = vadd.f32 %v2350, %v2578
    %v2580 = vand.u32 %v175, 4294901760
    %2581 = vmatmul.f32.gmra.mxu0 %v2580
    %v2582 = vpop.f32.mrf.mxu0
    %v2583 = vadd.f32 %v2356, %v2582
    %v2584 = vand.u32 %v177, 4294901760
    %2585 = vmatmul.f32.gmra.mxu0 %v2584
    %v2586 = vpop.f32.mrf.mxu0
    %v2587 = vadd.f32 %v2362, %v2586
    %v2588 = vand.u32 %v179, 4294901760
    %2589 = vmatmul.f32.gmra.mxu0 %v2588
    %v2590 = vpop.f32.mrf.mxu0
    %v2591 = vadd.f32 %v2368, %v2590
    %v2592 = vand.u32 %v181, 4294901760
    %2593 = vmatmul.f32.gmra.mxu0 %v2592
    %v2594 = vpop.f32.mrf.mxu0
    %v2595 = vadd.f32 %v2374, %v2594
    %v2596 = vand.u32 %v183, 4294901760
    %2597 = vmatmul.f32.gmra.mxu0 %v2596
    %v2598 = vpop.f32.mrf.mxu0
    %v2599 = vadd.f32 %v2380, %v2598
    %v2600 = vand.u32 %v185, 4294901760
    %2601 = vmatmul.f32.gmra.mxu0 %v2600
    %v2602 = vpop.f32.mrf.mxu0
    %v2603 = vadd.f32 %v2386, %v2602
    %v2604 = vand.u32 %v187, 4294901760
    %2605 = vmatmul.f32.gmra.mxu0 %v2604
    %v2606 = vpop.f32.mrf.mxu0
    %v2607 = vadd.f32 %v2392, %v2606
    %v2608 = vand.u32 %v189, 4294901760
    %2609 = vmatmul.f32.gmra.mxu0 %v2608
    %v2610 = vpop.f32.mrf.mxu0
    %v2611 = vadd.f32 %v2398, %v2610
    %v2612 = vand.u32 %v191, 4294901760
    %2613 = vmatmul.f32.gmra.mxu0 %v2612
    %v2614 = vpop.f32.mrf.mxu0
    %v2615 = vadd.f32 %v2404, %v2614
    %v2616 = vand.u32 %v193, 4294901760
    %2617 = vmatmul.f32.gmra.mxu0 %v2616
    %v2618 = vpop.f32.mrf.mxu0
    %v2619 = vadd.f32 %v2410, %v2618
    %v2620 = vand.u32 %v195, 4294901760
    %2621 = vmatmul.f32.gmra.mxu0 %v2620
    %v2622 = vpop.f32.mrf.mxu0
    %v2623 = vadd.f32 %v2416, %v2622
    %v2624 = vand.u32 %v197, 4294901760
    %2625 = vmatmul.f32.gmra.mxu0 %v2624
    %v2626 = vpop.f32.mrf.mxu0
    %v2627 = vadd.f32 %v2422, %v2626
    %v2628 = vand.u32 %v199, 4294901760
    %2629 = vmatmul.f32.gmra.mxu0 %v2628
    %v2630 = vpop.f32.mrf.mxu0
    %v2631 = vadd.f32 %v2428, %v2630
    %v2632 = vand.u32 %v201, 4294901760
    %2633 = vmatmul.f32.gmra.mxu0 %v2632
    %v2634 = vpop.f32.mrf.mxu0
    %v2635 = vadd.f32 %v2434, %v2634
    %v2636 = vand.u32 %v203, 4294901760
    %2637 = vmatmul.f32.gmra.mxu0 %v2636
    %v2638 = vpop.f32.mrf.mxu0
    %v2639 = vadd.f32 %v2440, %v2638
    %v2640 = vand.u32 %v205, 4294901760
    %2641 = vmatmul.f32.gmra.mxu0 %v2640
    %v2642 = vpop.f32.mrf.mxu0
    %v2643 = vadd.f32 %v2446, %v2642
    %v2644 = vand.u32 %v207, 4294901760
    %2645 = vmatmul.f32.gmra.mxu0 %v2644
    %v2646 = vpop.f32.mrf.mxu0
    %v2647 = vadd.f32 %v2452, %v2646
    %v2648 = vand.u32 %v209, 4294901760
    %2649 = vmatmul.f32.gmra.mxu0 %v2648
    %v2650 = vpop.f32.mrf.mxu0
    %v2651 = vadd.f32 %v2458, %v2650
    %2652 = vdwg.mxu0
    %v2653 = vand.u32 %v113, 4294901760
    %2654 = vmatpush.msra.mxu0 %v2653
    %v2655 = vand.u32 %v112, 4294901760
    %2656 = vmatpush.msra.mxu0 %v2655
    %v2657 = vand.u32 %v111, 4294901760
    %2658 = vmatpush.msra.mxu0 %v2657
    %v2659 = vand.u32 %v110, 4294901760
    %2660 = vmatpush.msra.mxu0 %v2659
    %v2661 = vand.u32 %v109, 4294901760
    %2662 = vmatpush.msra.mxu0 %v2661
    %v2663 = vand.u32 %v108, 4294901760
    %2664 = vmatpush.msra.mxu0 %v2663
    %v2665 = vand.u32 %v107, 4294901760
    %2666 = vmatpush.msra.mxu0 %v2665
    %v2667 = vand.u32 %v106, 4294901760
    %2668 = vmatpush.msra.mxu0 %v2667
    %v2669 = vand.u32 %v105, 4294901760
    %2670 = vmatpush.msra.mxu0 %v2669
    %v2671 = vand.u32 %v104, 4294901760
    %2672 = vmatpush.msra.mxu0 %v2671
    %v2673 = vand.u32 %v103, 4294901760
    %2674 = vmatpush.msra.mxu0 %v2673
    %v2675 = vand.u32 %v102, 4294901760
    %2676 = vmatpush.msra.mxu0 %v2675
    %v2677 = vand.u32 %v101, 4294901760
    %2678 = vmatpush.msra.mxu0 %v2677
    %v2679 = vand.u32 %v100, 4294901760
    %2680 = vmatpush.msra.mxu0 %v2679
    %v2681 = vand.u32 %v99, 4294901760
    %2682 = vmatpush.msra.mxu0 %v2681
    %v2683 = vand.u32 %v98, 4294901760
    %2684 = vmatpush.msra.mxu0 %v2683
    %v2685 = vand.u32 %v147, 4294901760
    %2686 = vmatmul.f32.gmra.mxu0 %v2685
    %v2687 = vpop.f32.mrf.mxu0
    %v2688 = vadd.f32 %v2527, %v2687
    %v2689 = vand.u32 %v149, 4294901760
    %2690 = vmatmul.f32.gmra.mxu0 %v2689
    %v2691 = vpop.f32.mrf.mxu0
    %v2692 = vadd.f32 %v2531, %v2691
    %v2693 = vand.u32 %v151, 4294901760
    %2694 = vmatmul.f32.gmra.mxu0 %v2693
    %v2695 = vpop.f32.mrf.mxu0
    %v2696 = vadd.f32 %v2535, %v2695
    %v2697 = vand.u32 %v153, 4294901760
    %2698 = vmatmul.f32.gmra.mxu0 %v2697
    %v2699 = vpop.f32.mrf.mxu0
    %v2700 = vadd.f32 %v2539, %v2699
    %v2701 = vand.u32 %v155, 4294901760
    %2702 = vmatmul.f32.gmra.mxu0 %v2701
    %v2703 = vpop.f32.mrf.mxu0
    %v2704 = vadd.f32 %v2543, %v2703
    %v2705 = vand.u32 %v157, 4294901760
    %2706 = vmatmul.f32.gmra.mxu0 %v2705
    %v2707 = vpop.f32.mrf.mxu0
    %v2708 = vadd.f32 %v2547, %v2707
    %v2709 = vand.u32 %v159, 4294901760
    %2710 = vmatmul.f32.gmra.mxu0 %v2709
    %v2711 = vpop.f32.mrf.mxu0
    %v2712 = vadd.f32 %v2551, %v2711
    %v2713 = vand.u32 %v161, 4294901760
    %2714 = vmatmul.f32.gmra.mxu0 %v2713
    %v2715 = vpop.f32.mrf.mxu0
    %v2716 = vadd.f32 %v2555, %v2715
    %v2717 = vand.u32 %v163, 4294901760
    %2718 = vmatmul.f32.gmra.mxu0 %v2717
    %v2719 = vpop.f32.mrf.mxu0
    %v2720 = vadd.f32 %v2559, %v2719
    %v2721 = vand.u32 %v165, 4294901760
    %2722 = vmatmul.f32.gmra.mxu0 %v2721
    %v2723 = vpop.f32.mrf.mxu0
    %v2724 = vadd.f32 %v2563, %v2723
    %v2725 = vand.u32 %v167, 4294901760
    %2726 = vmatmul.f32.gmra.mxu0 %v2725
    %v2727 = vpop.f32.mrf.mxu0
    %v2728 = vadd.f32 %v2567, %v2727
    %v2729 = vand.u32 %v169, 4294901760
    %2730 = vmatmul.f32.gmra.mxu0 %v2729
    %v2731 = vpop.f32.mrf.mxu0
    %v2732 = vadd.f32 %v2571, %v2731
    %v2733 = vand.u32 %v171, 4294901760
    %2734 = vmatmul.f32.gmra.mxu0 %v2733
    %v2735 = vpop.f32.mrf.mxu0
    %v2736 = vadd.f32 %v2575, %v2735
    %v2737 = vand.u32 %v173, 4294901760
    %2738 = vmatmul.f32.gmra.mxu0 %v2737
    %v2739 = vpop.f32.mrf.mxu0
    %v2740 = vadd.f32 %v2579, %v2739
    %v2741 = vand.u32 %v175, 4294901760
    %2742 = vmatmul.f32.gmra.mxu0 %v2741
    %v2743 = vpop.f32.mrf.mxu0
    %v2744 = vadd.f32 %v2583, %v2743
    %v2745 = vand.u32 %v177, 4294901760
    %2746 = vmatmul.f32.gmra.mxu0 %v2745
    %v2747 = vpop.f32.mrf.mxu0
    %v2748 = vadd.f32 %v2587, %v2747
    %v2749 = vand.u32 %v179, 4294901760
    %2750 = vmatmul.f32.gmra.mxu0 %v2749
    %v2751 = vpop.f32.mrf.mxu0
    %v2752 = vadd.f32 %v2591, %v2751
    %v2753 = vand.u32 %v181, 4294901760
    %2754 = vmatmul.f32.gmra.mxu0 %v2753
    %v2755 = vpop.f32.mrf.mxu0
    %v2756 = vadd.f32 %v2595, %v2755
    %v2757 = vand.u32 %v183, 4294901760
    %2758 = vmatmul.f32.gmra.mxu0 %v2757
    %v2759 = vpop.f32.mrf.mxu0
    %v2760 = vadd.f32 %v2599, %v2759
    %v2761 = vand.u32 %v185, 4294901760
    %2762 = vmatmul.f32.gmra.mxu0 %v2761
    %v2763 = vpop.f32.mrf.mxu0
    %v2764 = vadd.f32 %v2603, %v2763
    %v2765 = vand.u32 %v187, 4294901760
    %2766 = vmatmul.f32.gmra.mxu0 %v2765
    %v2767 = vpop.f32.mrf.mxu0
    %v2768 = vadd.f32 %v2607, %v2767
    %v2769 = vand.u32 %v189, 4294901760
    %2770 = vmatmul.f32.gmra.mxu0 %v2769
    %v2771 = vpop.f32.mrf.mxu0
    %v2772 = vadd.f32 %v2611, %v2771
    %v2773 = vand.u32 %v191, 4294901760
    %2774 = vmatmul.f32.gmra.mxu0 %v2773
    %v2775 = vpop.f32.mrf.mxu0
    %v2776 = vadd.f32 %v2615, %v2775
    %v2777 = vand.u32 %v193, 4294901760
    %2778 = vmatmul.f32.gmra.mxu0 %v2777
    %v2779 = vpop.f32.mrf.mxu0
    %v2780 = vadd.f32 %v2619, %v2779
    %v2781 = vand.u32 %v195, 4294901760
    %2782 = vmatmul.f32.gmra.mxu0 %v2781
    %v2783 = vpop.f32.mrf.mxu0
    %v2784 = vadd.f32 %v2623, %v2783
    %v2785 = vand.u32 %v197, 4294901760
    %2786 = vmatmul.f32.gmra.mxu0 %v2785
    %v2787 = vpop.f32.mrf.mxu0
    %v2788 = vadd.f32 %v2627, %v2787
    %v2789 = vand.u32 %v199, 4294901760
    %2790 = vmatmul.f32.gmra.mxu0 %v2789
    %v2791 = vpop.f32.mrf.mxu0
    %v2792 = vadd.f32 %v2631, %v2791
    %v2793 = vand.u32 %v201, 4294901760
    %2794 = vmatmul.f32.gmra.mxu0 %v2793
    %v2795 = vpop.f32.mrf.mxu0
    %v2796 = vadd.f32 %v2635, %v2795
    %v2797 = vand.u32 %v203, 4294901760
    %2798 = vmatmul.f32.gmra.mxu0 %v2797
    %v2799 = vpop.f32.mrf.mxu0
    %v2800 = vadd.f32 %v2639, %v2799
    %v2801 = vand.u32 %v205, 4294901760
    %2802 = vmatmul.f32.gmra.mxu0 %v2801
    %v2803 = vpop.f32.mrf.mxu0
    %v2804 = vadd.f32 %v2643, %v2803
    %v2805 = vand.u32 %v207, 4294901760
    %2806 = vmatmul.f32.gmra.mxu0 %v2805
    %v2807 = vpop.f32.mrf.mxu0
    %v2808 = vadd.f32 %v2647, %v2807
    %v2809 = vand.u32 %v209, 4294901760
    %2810 = vmatmul.f32.gmra.mxu0 %v2809
    %v2811 = vpop.f32.mrf.mxu0
    %v2812 = vadd.f32 %v2651, %v2811
    %2813 = vdwg.mxu0
    %v2814 = vadd.f32 %v114, %v2688
    %v2815 = vadd.f32 %v115, %v2692
    %v2816 = vadd.f32 %v116, %v2696
    %v2817 = vadd.f32 %v117, %v2700
    %v2818 = vadd.f32 %v118, %v2704
    %v2819 = vadd.f32 %v119, %v2708
    %v2820 = vadd.f32 %v120, %v2712
    %v2821 = vadd.f32 %v121, %v2716
    %v2822 = vadd.f32 %v122, %v2720
    %v2823 = vadd.f32 %v123, %v2724
    %v2824 = vadd.f32 %v124, %v2728
    %v2825 = vadd.f32 %v125, %v2732
    %v2826 = vadd.f32 %v126, %v2736
    %v2827 = vadd.f32 %v127, %v2740
    %v2828 = vadd.f32 %v128, %v2744
    %v2829 = vadd.f32 %v129, %v2748
    %v2830 = vadd.f32 %v130, %v2752
    %v2831 = vadd.f32 %v131, %v2756
    %v2832 = vadd.f32 %v132, %v2760
    %v2833 = vadd.f32 %v133, %v2764
    %v2834 = vadd.f32 %v134, %v2768
    %v2835 = vadd.f32 %v135, %v2772
    %v2836 = vadd.f32 %v136, %v2776
    %v2837 = vadd.f32 %v137, %v2780
    %v2838 = vadd.f32 %v138, %v2784
    %v2839 = vadd.f32 %v139, %v2788
    %v2840 = vadd.f32 %v140, %v2792
    %v2841 = vadd.f32 %v141, %v2796
    %v2842 = vadd.f32 %v142, %v2800
    %v2843 = vadd.f32 %v143, %v2804
    %v2844 = vadd.f32 %v144, %v2808
    %v2845 = vadd.f32 %v145, %v2812
    %2846 = vst [vmem:[#allocation7] sm:$0xff] %v2814
    %2847 = vst [vmem:[#allocation7 + $0x8] sm:$0xff] %v2815
    %2848 = vst [vmem:[#allocation7 + $0x10] sm:$0xff] %v2816
    %2849 = vst [vmem:[#allocation7 + $0x18] sm:$0xff] %v2817
    %2850 = vst [vmem:[#allocation7 + $0x20] sm:$0xff] %v2818
    %2851 = vst [vmem:[#allocation7 + $0x28] sm:$0xff] %v2819
    %2852 = vst [vmem:[#allocation7 + $0x30] sm:$0xff] %v2820
    %2853 = vst [vmem:[#allocation7 + $0x38] sm:$0xff] %v2821
    %2854 = vst [vmem:[#allocation7 + $0x40] sm:$0xff] %v2822
    %2855 = vst [vmem:[#allocation7 + $0x48] sm:$0xff] %v2823
    %2856 = vst [vmem:[#allocation7 + $0x50] sm:$0xff] %v2824
    %2857 = vst [vmem:[#allocation7 + $0x58] sm:$0xff] %v2825
    %2858 = vst [vmem:[#allocation7 + $0x60] sm:$0xff] %v2826
    %2859 = vst [vmem:[#allocation7 + $0x68] sm:$0xff] %v2827
    %2860 = vst [vmem:[#allocation7 + $0x70] sm:$0xff] %v2828
    %2861 = vst [vmem:[#allocation7 + $0x78] sm:$0xff] %v2829
    %2862 = vst [vmem:[#allocation7 + $0x80] sm:$0xff] %v2830
    %2863 = vst [vmem:[#allocation7 + $0x88] sm:$0xff] %v2831
    %2864 = vst [vmem:[#allocation7 + $0x90] sm:$0xff] %v2832
    %2865 = vst [vmem:[#allocation7 + $0x98] sm:$0xff] %v2833
    %2866 = vst [vmem:[#allocation7 + $0xa0] sm:$0xff] %v2834
    %2867 = vst [vmem:[#allocation7 + $0xa8] sm:$0xff] %v2835
    %2868 = vst [vmem:[#allocation7 + $0xb0] sm:$0xff] %v2836
    %2869 = vst [vmem:[#allocation7 + $0xb8] sm:$0xff] %v2837
    %2870 = vst [vmem:[#allocation7 + $0xc0] sm:$0xff] %v2838
    %2871 = vst [vmem:[#allocation7 + $0xc8] sm:$0xff] %v2839
    %2872 = vst [vmem:[#allocation7 + $0xd0] sm:$0xff] %v2840
    %2873 = vst [vmem:[#allocation7 + $0xd8] sm:$0xff] %v2841
    %2874 = vst [vmem:[#allocation7 + $0xe0] sm:$0xff] %v2842
    %2875 = vst [vmem:[#allocation7 + $0xe8] sm:$0xff] %v2843
    %2876 = vst [vmem:[#allocation7 + $0xf0] sm:$0xff] %v2844
    %2877 = vst [vmem:[#allocation7 + $0xf8] sm:$0xff] %v2845
    // Predicated region
    $region22: #{matmul_ab.1} parent=1 // pred_check
      _
    $region23: #{matmul_ab.1} parent=1 // pred_check_branch
      %2879 = sbr.rel (0) target = $region25
    $region24: #{matmul_ab.1} parent=1 // pred_region
      %2881 = vsyncadd [#allocation4], 0
      %s2882 = sshll.u32 [#allocation7], 4
      %s2883 = int_to_ptr.vmem [resolvable:$true] %s2882
      %s2884 = sshll.u32 %s2, 4
      %s2885 = int_to_ptr.hbm [resolvable:$true] %s2884
      %2890 = dma.vmem_to_hbm [thread:$0]  %s2883, 4096, %s2885, [#allocation4], 128, 128, 8
    $region25: #{matmul_ab.1} parent=1 // pred_fallthru
      _
    // Predicated region
    $region26: #{matmul_ab.1} parent=1 // pred_check
      _
    $region27: #{matmul_ab.1} parent=1 // pred_check_branch
      %2892 = sbr.rel (0) target = $region29
    $region28: #{matmul_ab.1} parent=1 // pred_region
      %2894 = dma.done [#allocation4], 4096
    $region29: #{matmul_ab.1} parent=1 // pred_fallthru
      _
    %2895 = vsyncpa [#allocation3], 1
    %2896 = vsyncpa [#allocation6], 1
    %2897 = vsyncpa [#allocation4], 1

</llo_original>
